<compile_context>
chip_gen: v5e
topology: v5e:2x2
jax: 0.10.0
libtpu: 0.0.40
codegen_flags: <defaults>
</compile_context>

<pallas_src>
import jax
import jax.numpy as jnp
from jax import lax
from jax.experimental import pallas as pl
from jax.experimental.pallas import tpu as pltpu


def _round_up(a, b):
    return ((a + b - 1) // b) * b


def _attn_vmem_bytes(C, cq, tile, n_pad):
    """Rough per-step VMEM footprint of the attention kernel (bytes)."""
    est = 0
    est += 2 * tile * cq * 2        # qT blocks (bf16, double-buffered)
    est += 2 * cq * n_pad * 2       # k block (bf16, resident per batch)
    est += 2 * C * tile * 2         # v blocks (bf16)
    est += 2 * 8 * n_pad * 4        # mask-bias block (f32, padded to 8 sublanes)
    est += 2 * C * n_pad * 2        # bf16 output block
    est += C * n_pad * 4            # f32 accumulator scratch
    est += 3 * tile * n_pad * 4     # score / exp / prob slab temporaries (f32)
    est += tile * n_pad * 2         # bf16 attention slab
    est += 4 * C * 128 * 4          # per-batch stats outputs (padded)
    return est


def _select_attention_tiling(N, C, cq):
    """Generation-aware (tile, n_pad, vmem_limit, vmem_physical) selection."""
    kind = ""
    try:
        kind = jax.devices()[0].device_kind.lower()
    except Exception:
        pass
    if "v7" in kind:
        phys, cap, max_tile = 64 << 20, 56 << 20, 256      # v7x: 64 MiB physical VMEM
    elif ("v5" in kind) or ("v6" in kind):
        phys, cap, max_tile = 128 << 20, 100 << 20, 512    # v5e / v6e: 128 MiB physical
    else:
        phys, cap, max_tile = 64 << 20, 48 << 20, 256      # unknown chip: be conservative

    n_128 = _round_up(N, 128)
    tile, n_pad = None, None
    t = max_tile
    while t >= 128:
        cand = min(t, n_128)
        npad = _round_up(N, cand)
        if _attn_vmem_bytes(C, cq, cand, npad) <= cap - (8 << 20):
            tile, n_pad = cand, npad
            break
        t //= 2
    if tile is None:  # even tile=128 overflows the soft cap: take it and use near-physical VMEM
        tile = min(128, n_128)
        n_pad = _round_up(N, tile)

    est = _attn_vmem_bytes(C, cq, tile, n_pad)
    want = max(32 << 20, est + (8 << 20))
    vmem_limit = int(want if want <= cap else min(want, phys - (4 << 20)))
    return tile, n_pad, vmem_limit, phys


def _attention_kernel(qt_ref, k_ref, v_ref, bias_ref, o_ref, sum_ref, sumsq_ref, acc_scr):
    """Grid = (batch, contraction-pixel tile); softmax axis (output pixels) fully resident.

    Block shapes:
      qt_ref   : (1, tile, Cqp) bf16  -- Q rows for this contraction tile, pre-transposed
      k_ref    : (1, Cqp, Npad) bf16  -- resident across the tile axis
      v_ref    : (1, C, tile)   bf16  -- V columns for this tile (padded columns pre-zeroed)
      bias_ref : (1, Npad)      f32   -- 0 on valid output pixels, -1e30 on padded ones
      o_ref    : (1, C, Npad)   bf16  -- written in the epilogue only
      sum_ref / sumsq_ref : (1, C, 1) f32 -- per-batch per-channel BN statistics
      acc_scr  : (C, Npad)      f32   -- output accumulator across contraction tiles
    """
    t = pl.program_id(1)

    @pl.when(t == 0)
    def _init():
        acc_scr[...] = jnp.zeros_like(acc_scr)

    # Scores for this contraction tile: s[r, j] = sum_c q[c, r] * k[c, j]  (+ mask bias on padded j).
    s = jnp.dot(qt_ref[0], k_ref[0], preferred_element_type=jnp.float32)     # (tile, Npad) f32
    s = s + bias_ref[...]

    # Exact softmax over the fully-resident output-pixel axis (f32 state).
    m_row = jnp.max(s, axis=-1, keepdims=True)
    p = jnp.exp(s - m_row)
    l_row = jnp.sum(p, axis=-1, keepdims=True)
    a = (p * pl.reciprocal(l_row, approx=True)).astype(jnp.bfloat16)         # (tile, Npad)

    # out[c, j] += sum_r v[c, r] * a[r, j]
    acc_scr[...] += jnp.dot(v_ref[0], a, preferred_element_type=jnp.float32)

    @pl.when(t == pl.num_programs(1) - 1)
    def _epilogue():
        acc = acc_scr[...]                                                    # (C, Npad) f32
        sum_ref[0] = jnp.sum(acc, axis=-1, keepdims=True)                     # stats in f32, pre-cast
        sumsq_ref[0] = jnp.sum(acc * acc, axis=-1, keepdims=True)
        o_ref[0] = acc.astype(o_ref.dtype)


def _bn_residual_kernel(x_ref, y_ref, scale_ref, shift_ref, o_ref):
    """out = x + (y * scale + shift) * 1e-5  (per-channel affine folded from BatchNorm2d)."""
    y = y_ref[0].astype(jnp.float32)
    o_ref[0] = x_ref[0] + (y * scale_ref[...] + shift_ref[...]) * 1e-5


def self_attention_forward(x, params):
    B, C, H, W = x.shape
    N = H * W
    cq = params["wq"].shape[0]
    cq_pad = _round_up(cq, 128)      # zero-pad the tiny projection dim to one full lane group

    tile, n_pad, vmem_attn, phys = _select_attention_tiling(N, C, cq_pad)
    n_steps = n_pad // tile

    x_flat = x.reshape(B, C, N).astype(jnp.float32)
    x_pad = jnp.pad(x_flat, ((0, 0), (0, 0), (0, n_pad - N)))

    wq, bq = params["wq"], params["bq"]
    wk, bk = params["wk"], params["bk"]
    wv, bv = params["wv"], params["bv"]
    bn_w, bn_b = params["bn_w"], params["bn_b"]

    # 1x1-conv projections: tiny GEMMs done once here, pipelined into the kernel as inputs.
    q = jnp.einsum("oc,bcn->bon", wq, x_pad) + bq[None]                   # (B, Cq, Npad)
    k = jnp.einsum("oc,bcn->bon", wk, x_pad) + bk[None]                   # (B, Cq, Npad)
    v = jnp.einsum("oc,bcn->bon", wv, x_pad) + bv[None]                   # (B, C,  Npad)

    col = jnp.arange(n_pad)
    v = jnp.where(col[None, None, :] < N, v, 0.0)   # padded contraction pixels contribute nothing
    if cq_pad > cq:
        q = jnp.pad(q, ((0, 0), (0, cq_pad - cq), (0, 0)))
        k = jnp.pad(k, ((0, 0), (0, cq_pad - cq), (0, 0)))

    q_t = jnp.swapaxes(q, 1, 2).astype(jnp.bfloat16)                      # (B, Npad, Cqp)
    k_bf = k.astype(jnp.bfloat16)
    v_bf = v.astype(jnp.bfloat16)
    bias = jnp.where(col < N, 0.0, -1e30).astype(jnp.float32)[None, :]    # (1, Npad) softmax mask

    attn_out, csum, csumsq = pl.pallas_call(
        _attention_kernel,
        out_shape=(
            jax.ShapeDtypeStruct((B, C, n_pad), jnp.bfloat16),
            jax.ShapeDtypeStruct((B, C, 1), jnp.float32),
            jax.ShapeDtypeStruct((B, C, 1), jnp.float32),
        ),
        grid_spec=pltpu.PrefetchScalarGridSpec(
            num_scalar_prefetch=0,
            grid=(B, n_steps),
            in_specs=[
                pl.BlockSpec((1, tile, cq_pad), lambda b, t: (b, t, 0)),
                pl.BlockSpec((1, cq_pad, n_pad), lambda b, t: (b, 0, 0)),
                pl.BlockSpec((1, C, tile), lambda b, t: (b, 0, t)),
                pl.BlockSpec((1, n_pad), lambda b, t: (0, 0)),
            ],
            out_specs=[
                pl.BlockSpec((1, C, n_pad), lambda b, t: (b, 0, 0)),
                pl.BlockSpec((1, C, 1), lambda b, t: (b, 0, 0)),
                pl.BlockSpec((1, C, 1), lambda b, t: (b, 0, 0)),
            ],
            scratch_shapes=[pltpu.VMEM((C, n_pad), jnp.float32)],
        ),
        compiler_params=pltpu.CompilerParams(
            dimension_semantics=("parallel", "arbitrary"),
            vmem_limit_bytes=vmem_attn),
    )(q_t, k_bf, v_bf, bias)

    # BatchNorm2d (training-mode batch statistics, biased variance, eps=1e-5) from in-kernel sums.
    eps = 1e-5
    cnt = float(B * N)
    mean = jnp.sum(csum[:, :, 0], axis=0) / cnt                            # (C,)
    ex2 = jnp.sum(csumsq[:, :, 0], axis=0) / cnt
    var = jnp.maximum(ex2 - mean * mean, 0.0)
    inv_std = lax.rsqrt(var + eps)
    scale = (bn_w * inv_std)[:, None].astype(jnp.float32)                  # (C, 1)
    shift = (bn_b - bn_w * mean * inv_std)[:, None].astype(jnp.float32)    # (C, 1)

    # BN + residual: pure HBM-bandwidth pass, tiled along the pixel axis.
    tn = 128
    cand = min(n_pad, 1024)
    while cand >= 128:
        if n_pad % cand == 0:
            tn = cand
            break
        cand -= 128
    bn_est = 2 * C * tn * (4 + 2 + 4) + 4 * C * 128 * 4
    vmem_bn = int(min(phys - (4 << 20), max(32 << 20, 4 * bn_est)))

    out = pl.pallas_call(
        _bn_residual_kernel,
        out_shape=jax.ShapeDtypeStruct((B, C, n_pad), jnp.float32),
        grid_spec=pltpu.PrefetchScalarGridSpec(
            num_scalar_prefetch=0,
            grid=(B, n_pad // tn),
            in_specs=[
                pl.BlockSpec((1, C, tn), lambda b, j: (b, 0, j)),
                pl.BlockSpec((1, C, tn), lambda b, j: (b, 0, j)),
                pl.BlockSpec((C, 1), lambda b, j: (0, 0)),
                pl.BlockSpec((C, 1), lambda b, j: (0, 0)),
            ],
            out_specs=pl.BlockSpec((1, C, tn), lambda b, j: (b, 0, j)),
        ),
        compiler_params=pltpu.CompilerParams(
            dimension_semantics=("parallel", "parallel"),
            vmem_limit_bytes=vmem_bn),
    )(x_pad, attn_out, scale, shift)

    return out[:, :, :N].reshape(B, C, H, W)


def _reference(x, params):
    """Pure-JAX f32 reference mirroring the PyTorch forward."""
    B, C, H, W = x.shape
    N = H * W
    xf = x.reshape(B, C, N)
    q = jnp.einsum("oc,bcn->bon", params["wq"], xf) + params["bq"][None]
    k = jnp.einsum("oc,bcn->bon", params["wk"], xf) + params["bk"][None]
    v = jnp.einsum("oc,bcn->bon", params["wv"], xf) + params["bv"][None]
    scores = jnp.einsum("bci,bcj->bij", q, k)
    attn = jax.nn.softmax(scores, axis=-1)
    y = jnp.einsum("bcj,bji->bci", v, attn)
    eps = 1e-5
    mean = jnp.mean(y, axis=(0, 2), keepdims=True)
    var = jnp.mean((y - mean) ** 2, axis=(0, 2), keepdims=True)
    y_bn = (y - mean) / jnp.sqrt(var + eps)
    y_bn = y_bn * params["bn_w"][None, :, None] + params["bn_b"][None, :, None]
    out = xf + y_bn * 1e-5
    return out.reshape(B, C, H, W)


if __name__ == "__main__":
    # out_channels = 16 -> C//8 = 2; N = 18*18 = 324 (padded per-generation to a multiple of tile).
    B, C, H, W = 2, 16, 18, 18
    Cq = C // 8

    key = jax.random.PRNGKey(0)
    kx, kq, kk, kv, kbq, kbk, kbv = jax.random.split(key, 7)

    x = jax.random.normal(kx, (B, C, H, W), dtype=jnp.float32)

    params = {
        # 1x1 conv weights stored as (out_ch, in_ch); biases as (out_ch, 1)
        "wq": jax.random.normal(kq, (Cq, C), dtype=jnp.float32) * 0.1,
        "bq": jax.random.normal(kbq, (Cq, 1), dtype=jnp.float32) * 0.1,
        "wk": jax.random.normal(kk, (Cq, C), dtype=jnp.float32) * 0.1,
        "bk": jax.random.normal(kbk, (Cq, 1), dtype=jnp.float32) * 0.1,
        "wv": jax.random.normal(kv, (C, C), dtype=jnp.float32) * 0.1,
        "bv": jax.random.normal(kbv, (C, 1), dtype=jnp.float32) * 0.1,
        # BatchNorm2d default affine init: weight=1, bias=0
        "bn_w": jnp.ones((C,), dtype=jnp.float32),
        "bn_b": jnp.zeros((C,), dtype=jnp.float32),
    }

    out = jax.block_until_ready(jax.jit(self_attention_forward)(x, params))
    ref = _reference(x, params)

    assert out.shape == (B, C, H, W)
    max_err = float(jnp.max(jnp.abs(out - ref)))
    assert jnp.allclose(out, ref, atol=2e-5, rtol=1e-5), f"mismatch vs reference (max abs err {max_err})"

    print("KERNEL_OK")
</pallas_src>

<mosaic_0001>
module attributes {stable_mosaic.version = 11 : i64} {
  func.func @_attention_kernel(%arg0: i32, %arg1: i32, %arg2: memref<1x256x128xbf16, #tpu.memory_space<vmem>>, %arg3: memref<1x128x512xbf16, #tpu.memory_space<vmem>>, %arg4: memref<1x16x256xbf16, #tpu.memory_space<vmem>>, %arg5: memref<1x512xf32, #tpu.memory_space<vmem>>, %arg6: memref<1x16x512xbf16, #tpu.memory_space<vmem>>, %arg7: memref<1x16x1xf32, #tpu.memory_space<vmem>>, %arg8: memref<1x16x1xf32, #tpu.memory_space<vmem>>, %arg9: memref<16x512xf32, #tpu.memory_space<vmem>>) attributes {dimension_semantics = [#tpu.dimension_semantics<parallel>, #tpu.dimension_semantics<arbitrary>], iteration_bounds = array<i64: 2, 2>, scalar_prefetch = 0 : i64, scratch_operands = 1 : i64, tpu.core_type = #tpu.core_type<tc>, window_params = [{transform_indices = @transform_0, window_bounds = array<i64: 1, 256, 128>}, {transform_indices = @transform_1, window_bounds = array<i64: 1, 128, 512>}, {transform_indices = @transform_2, window_bounds = array<i64: 1, 16, 256>}, {pipeline_mode = #tpu.pipeline_mode<synchronous>, transform_indices = @transform_3, window_bounds = array<i64: 1, 512>}, {transform_indices = @transform_4, window_bounds = array<i64: 1, 16, 512>}, {transform_indices = @transform_5, window_bounds = array<i64: 1, 16, 1>}, {transform_indices = @transform_6, window_bounds = array<i64: 1, 16, 1>}]} {
    %c0_i32 = arith.constant 0 : i32
    %0 = arith.cmpi eq, %arg1, %c0_i32 : i32
    %1 = arith.extui %0 : i1 to i32
    %c0_i32_0 = arith.constant 0 : i32
    %2 = arith.cmpi ne, %1, %c0_i32_0 : i32
    scf.if %2 {
      %cst_19 = arith.constant 0.000000e+00 : f32
      %31 = vector.broadcast %cst_19 : f32 to vector<16x512xf32>
      %c0_20 = arith.constant 0 : index
      %c0_21 = arith.constant 0 : index
      %32 = vector.load %arg9[%c0_20, %c0_21] : memref<16x512xf32, #tpu.memory_space<vmem>>, vector<16x512xf32>
      tpu.vector_store %arg9[%c0_20, %c0_21], %31 {strides = array<i32>} : memref<16x512xf32, #tpu.memory_space<vmem>>, vector<16x512xf32>,
    } else {
    }
    %c0 = arith.constant 0 : index
    %c0_1 = arith.constant 0 : index
    %c0_2 = arith.constant 0 : index
    %3 = vector.load %arg2[%c0, %c0_1, %c0_2] : memref<1x256x128xbf16, #tpu.memory_space<vmem>>, vector<1x256x128xbf16>
    %4 = vector.shape_cast %3 : vector<1x256x128xbf16> to vector<256x128xbf16>
    %c0_3 = arith.constant 0 : index
    %c0_4 = arith.constant 0 : index
    %c0_5 = arith.constant 0 : index
    %5 = vector.load %arg3[%c0_3, %c0_4, %c0_5] : memref<1x128x512xbf16, #tpu.memory_space<vmem>>, vector<1x128x512xbf16>
    %6 = vector.shape_cast %5 : vector<1x128x512xbf16> to vector<128x512xbf16>
    %cst = arith.constant dense<0.000000e+00> : vector<256x512xf32>
    %7 = tpu.matmul %4, %6, %cst {dimension_numbers = #tpu.dot_dimension_numbers<[1], [0], [0], [1], [0, 0, 1, 1], [], []>} : vector<256x128xbf16>, vector<128x512xbf16>, vector<256x512xf32> -> vector<256x512xf32>
    %c0_6 = arith.constant 0 : index
    %c0_7 = arith.constant 0 : index
    %8 = vector.load %arg5[%c0_6, %c0_7] : memref<1x512xf32, #tpu.memory_space<vmem>>, vector<1x512xf32>
    %9 = vector.broadcast %8 : vector<1x512xf32> to vector<256x512xf32>
    %10 = arith.addf %7, %9 : vector<256x512xf32>
    %cst_8 = arith.constant dense<0xFF800000> : vector<256xf32>
    %11 = vector.multi_reduction <maximumf>, %10, %cst_8 [1] : vector<256x512xf32> to vector<256xf32>
    %12 = vector.shape_cast %11 : vector<256xf32> to vector<256x1xf32>
    %13 = vector.broadcast %12 : vector<256x1xf32> to vector<256x512xf32>
    %14 = arith.subf %10, %13 : vector<256x512xf32>
    %15 = math.exp %14 : vector<256x512xf32>
    %cst_9 = arith.constant dense<0.000000e+00> : vector<256xf32>
    %16 = vector.multi_reduction <add>, %15, %cst_9 [1] : vector<256x512xf32> to vector<256xf32>
    %17 = vector.shape_cast %16 : vector<256xf32> to vector<256x1xf32>
    %18 = tpu.reciprocal %17 {approx = true} : vector<256x1xf32> -> vector<256x1xf32>
    %19 = vector.broadcast %18 : vector<256x1xf32> to vector<256x512xf32>
    %20 = arith.mulf %15, %19 : vector<256x512xf32>
    %21 = arith.truncf %20 : vector<256x512xf32> to vector<256x512xbf16>
    %c0_10 = arith.constant 0 : index
    %c0_11 = arith.constant 0 : index
    %22 = vector.load %arg9[%c0_10, %c0_11] : memref<16x512xf32, #tpu.memory_space<vmem>>, vector<16x512xf32>
    %c0_12 = arith.constant 0 : index
    %c0_13 = arith.constant 0 : index
    %c0_14 = arith.constant 0 : index
    %23 = vector.load %arg4[%c0_12, %c0_13, %c0_14] : memref<1x16x256xbf16, #tpu.memory_space<vmem>>, vector<1x16x256xbf16>
    %24 = vector.shape_cast %23 : vector<1x16x256xbf16> to vector<16x256xbf16>
    %cst_15 = arith.constant dense<0.000000e+00> : vector<16x512xf32>
    %25 = tpu.matmul %24, %21, %cst_15 {dimension_numbers = #tpu.dot_dimension_numbers<[1], [0], [0], [1], [0, 0, 1, 1], [], []>} : vector<16x256xbf16>, vector<256x512xbf16>, vector<16x512xf32> -> vector<16x512xf32>
    %26 = arith.addf %22, %25 : vector<16x512xf32>
    %c0_16 = arith.constant 0 : index
    %c0_17 = arith.constant 0 : index
    %27 = vector.load %arg9[%c0_16, %c0_17] : memref<16x512xf32, #tpu.memory_space<vmem>>, vector<16x512xf32>
    tpu.vector_store %arg9[%c0_16, %c0_17], %26 {strides = array<i32>} : memref<16x512xf32, #tpu.memory_space<vmem>>, vector<16x512xf32>,
    %c1_i32 = arith.constant 1 : i32
    %28 = arith.cmpi eq, %arg1, %c1_i32 : i32
    %29 = arith.extui %28 : i1 to i32
    %c0_i32_18 = arith.constant 0 : i32
    %30 = arith.cmpi ne, %29, %c0_i32_18 : i32
    scf.if %30 {
      %c0_19 = arith.constant 0 : index
      %c0_20 = arith.constant 0 : index
      %31 = vector.load %arg9[%c0_19, %c0_20] : memref<16x512xf32, #tpu.memory_space<vmem>>, vector<16x512xf32>
      %cst_21 = arith.constant dense<0.000000e+00> : vector<16xf32>
      %32 = vector.multi_reduction <add>, %31, %cst_21 [1] : vector<16x512xf32> to vector<16xf32>
      %33 = vector.shape_cast %32 : vector<16xf32> to vector<16x1xf32>
      %c0_22 = arith.constant 0 : index
      %c0_23 = arith.constant 0 : index
      %c0_24 = arith.constant 0 : index
      %34 = vector.load %arg7[%c0_22, %c0_23, %c0_24] : memref<1x16x1xf32, #tpu.memory_space<vmem>>, vector<1x16x1xf32>
      %35 = vector.shape_cast %34 : vector<1x16x1xf32> to vector<16x1xf32>
      %36 = vector.shape_cast %33 : vector<16x1xf32> to vector<1x16x1xf32>
      tpu.vector_store %arg7[%c0_22, %c0_23, %c0_24], %36 {strides = array<i32>} : memref<1x16x1xf32, #tpu.memory_space<vmem>>, vector<1x16x1xf32>,
      %37 = arith.mulf %31, %31 : vector<16x512xf32>
      %cst_25 = arith.constant dense<0.000000e+00> : vector<16xf32>
      %38 = vector.multi_reduction <add>, %37, %cst_25 [1] : vector<16x512xf32> to vector<16xf32>
      %39 = vector.shape_cast %38 : vector<16xf32> to vector<16x1xf32>
      %c0_26 = arith.constant 0 : index
      %c0_27 = arith.constant 0 : index
      %c0_28 = arith.constant 0 : index
      %40 = vector.load %arg8[%c0_26, %c0_27, %c0_28] : memref<1x16x1xf32, #tpu.memory_space<vmem>>, vector<1x16x1xf32>
      %41 = vector.shape_cast %40 : vector<1x16x1xf32> to vector<16x1xf32>
      %42 = vector.shape_cast %39 : vector<16x1xf32> to vector<1x16x1xf32>
      tpu.vector_store %arg8[%c0_26, %c0_27, %c0_28], %42 {strides = array<i32>} : memref<1x16x1xf32, #tpu.memory_space<vmem>>, vector<1x16x1xf32>,
      %43 = arith.truncf %31 : vector<16x512xf32> to vector<16x512xbf16>
      %c0_29 = arith.constant 0 : index
      %c0_30 = arith.constant 0 : index
      %c0_31 = arith.constant 0 : index
      %44 = vector.load %arg6[%c0_29, %c0_30, %c0_31] : memref<1x16x512xbf16, #tpu.memory_space<vmem>>, vector<1x16x512xbf16>
      %45 = vector.shape_cast %44 : vector<1x16x512xbf16> to vector<16x512xbf16>
      %46 = vector.shape_cast %43 : vector<16x512xbf16> to vector<1x16x512xbf16>
      tpu.vector_store %arg6[%c0_29, %c0_30, %c0_31], %46 {strides = array<i32>} : memref<1x16x512xbf16, #tpu.memory_space<vmem>>, vector<1x16x512xbf16>,
    } else {
    }
    return
  }
  func.func @transform_0(%arg0: i32, %arg1: i32) -> (i32, i32, i32) {
    %c0_i32 = arith.constant 0 : i32
    %c0_i32_0 = arith.constant 0 : i32
    return %arg0, %arg1, %c0_i32 : i32, i32, i32
  }
  func.func @transform_1(%arg0: i32, %arg1: i32) -> (i32, i32, i32) {
    %c0_i32 = arith.constant 0 : i32
    %c0_i32_0 = arith.constant 0 : i32
    %c0_i32_1 = arith.constant 0 : i32
    return %arg0, %c0_i32, %c0_i32_0 : i32, i32, i32
  }
  func.func @transform_2(%arg0: i32, %arg1: i32) -> (i32, i32, i32) {
    %c0_i32 = arith.constant 0 : i32
    %c0_i32_0 = arith.constant 0 : i32
    return %arg0, %c0_i32, %arg1 : i32, i32, i32
  }
  func.func @transform_3(%arg0: i32, %arg1: i32) -> (i32, i32) {
    %c0_i32 = arith.constant 0 : i32
    %c0_i32_0 = arith.constant 0 : i32
    %c0_i32_1 = arith.constant 0 : i32
    return %c0_i32, %c0_i32_0 : i32, i32
  }
  func.func @transform_4(%arg0: i32, %arg1: i32) -> (i32, i32, i32) {
    %c0_i32 = arith.constant 0 : i32
    %c0_i32_0 = arith.constant 0 : i32
    %c0_i32_1 = arith.constant 0 : i32
    return %arg0, %c0_i32, %c0_i32_0 : i32, i32, i32
  }
  func.func @transform_5(%arg0: i32, %arg1: i32) -> (i32, i32, i32) {
    %c0_i32 = arith.constant 0 : i32
    %c0_i32_0 = arith.constant 0 : i32
    %c0_i32_1 = arith.constant 0 : i32
    return %arg0, %c0_i32, %c0_i32_0 : i32, i32, i32
  }
  func.func @transform_6(%arg0: i32, %arg1: i32) -> (i32, i32, i32) {
    %c0_i32 = arith.constant 0 : i32
    %c0_i32_0 = arith.constant 0 : i32
    %c0_i32_1 = arith.constant 0 : i32
    return %arg0, %c0_i32, %c0_i32_0 : i32, i32, i32
  }
}

module attributes {stable_mosaic.version = 11 : i64} {
  func.func @_bn_residual_kernel(%arg0: i32, %arg1: i32, %arg2: memref<1x16x512xf32, #tpu.memory_space<vmem>>, %arg3: memref<1x16x512xbf16, #tpu.memory_space<vmem>>, %arg4: memref<16x1xf32, #tpu.memory_space<vmem>>, %arg5: memref<16x1xf32, #tpu.memory_space<vmem>>, %arg6: memref<1x16x512xf32, #tpu.memory_space<vmem>>) attributes {dimension_semantics = [#tpu.dimension_semantics<parallel>, #tpu.dimension_semantics<parallel>], iteration_bounds = array<i64: 2, 1>, scalar_prefetch = 0 : i64, scratch_operands = 0 : i64, tpu.core_type = #tpu.core_type<tc>, window_params = [{transform_indices = @transform_0, window_bounds = array<i64: 1, 16, 512>}, {transform_indices = @transform_1, window_bounds = array<i64: 1, 16, 512>}, {pipeline_mode = #tpu.pipeline_mode<synchronous>, transform_indices = @transform_2, window_bounds = array<i64: 16, 1>}, {pipeline_mode = #tpu.pipeline_mode<synchronous>, transform_indices = @transform_3, window_bounds = array<i64: 16, 1>}, {transform_indices = @transform_4, window_bounds = array<i64: 1, 16, 512>}]} {
    %c0 = arith.constant 0 : index
    %c0_0 = arith.constant 0 : index
    %c0_1 = arith.constant 0 : index
    %0 = vector.load %arg3[%c0, %c0_0, %c0_1] : memref<1x16x512xbf16, #tpu.memory_space<vmem>>, vector<1x16x512xbf16>
    %1 = vector.shape_cast %0 : vector<1x16x512xbf16> to vector<16x512xbf16>
    %2 = arith.extf %1 : vector<16x512xbf16> to vector<16x512xf32>
    %c0_2 = arith.constant 0 : index
    %c0_3 = arith.constant 0 : index
    %c0_4 = arith.constant 0 : index
    %3 = vector.load %arg2[%c0_2, %c0_3, %c0_4] : memref<1x16x512xf32, #tpu.memory_space<vmem>>, vector<1x16x512xf32>
    %4 = vector.shape_cast %3 : vector<1x16x512xf32> to vector<16x512xf32>
    %c0_5 = arith.constant 0 : index
    %c0_6 = arith.constant 0 : index
    %5 = vector.load %arg4[%c0_5, %c0_6] : memref<16x1xf32, #tpu.memory_space<vmem>>, vector<16x1xf32>
    %6 = vector.broadcast %5 : vector<16x1xf32> to vector<16x512xf32>
    %7 = arith.mulf %2, %6 : vector<16x512xf32>
    %c0_7 = arith.constant 0 : index
    %c0_8 = arith.constant 0 : index
    %8 = vector.load %arg5[%c0_7, %c0_8] : memref<16x1xf32, #tpu.memory_space<vmem>>, vector<16x1xf32>
    %9 = vector.broadcast %8 : vector<16x1xf32> to vector<16x512xf32>
    %10 = arith.addf %7, %9 : vector<16x512xf32>
    %cst = arith.constant 9.99999974E-6 : f32
    %11 = vector.broadcast %cst : f32 to vector<16x512xf32>
    %12 = arith.mulf %10, %11 : vector<16x512xf32>
    %13 = arith.addf %4, %12 : vector<16x512xf32>
    %c0_9 = arith.constant 0 : index
    %c0_10 = arith.constant 0 : index
    %c0_11 = arith.constant 0 : index
    %14 = vector.load %arg6[%c0_9, %c0_10, %c0_11] : memref<1x16x512xf32, #tpu.memory_space<vmem>>, vector<1x16x512xf32>
    %15 = vector.shape_cast %14 : vector<1x16x512xf32> to vector<16x512xf32>
    %16 = vector.shape_cast %13 : vector<16x512xf32> to vector<1x16x512xf32>
    tpu.vector_store %arg6[%c0_9, %c0_10, %c0_11], %16 {strides = array<i32>} : memref<1x16x512xf32, #tpu.memory_space<vmem>>, vector<1x16x512xf32>,
    return
  }
  func.func @transform_0(%arg0: i32, %arg1: i32) -> (i32, i32, i32) {
    %c0_i32 = arith.constant 0 : i32
    %c0_i32_0 = arith.constant 0 : i32
    return %arg0, %c0_i32, %arg1 : i32, i32, i32
  }
  func.func @transform_1(%arg0: i32, %arg1: i32) -> (i32, i32, i32) {
    %c0_i32 = arith.constant 0 : i32
    %c0_i32_0 = arith.constant 0 : i32
    return %arg0, %c0_i32, %arg1 : i32, i32, i32
  }
  func.func @transform_2(%arg0: i32, %arg1: i32) -> (i32, i32) {
    %c0_i32 = arith.constant 0 : i32
    %c0_i32_0 = arith.constant 0 : i32
    %c0_i32_1 = arith.constant 0 : i32
    return %c0_i32, %c0_i32_0 : i32, i32
  }
  func.func @transform_3(%arg0: i32, %arg1: i32) -> (i32, i32) {
    %c0_i32 = arith.constant 0 : i32
    %c0_i32_0 = arith.constant 0 : i32
    %c0_i32_1 = arith.constant 0 : i32
    return %c0_i32, %c0_i32_0 : i32, i32
  }
  func.func @transform_4(%arg0: i32, %arg1: i32) -> (i32, i32, i32) {
    %c0_i32 = arith.constant 0 : i32
    %c0_i32_0 = arith.constant 0 : i32
    return %arg0, %c0_i32, %arg1 : i32, i32, i32
  }
}

</mosaic_0001>

<llo_original>
// kernel: self_attention_forward.3
$region0: #{self_attention_forward.3}
  #allocation0 [shape = 'u32[]', space=smem, size = 0x4, offset = 0x4, fixed_abs, tag = 'smem constant byte address 0x4 - core index']
  #allocation1 [shape = 'u32[72,128]{1,0:T(1,128)}', space=vmem, size = 0x9000, scoped, tag = 'internal scratch']
  %s0 = inlined_call_operand.vmem [shape: f32[2,16,512], index: 0, kind: input, shape index: {}]
  %s1 = inlined_call_operand.vmem [shape: bf16[2,16,512], index: 1, kind: input, shape index: {}]
  %s2 = inlined_call_operand.vmem [shape: f32[16,1], index: 2, kind: input, shape index: {}]
  %s3 = inlined_call_operand.vmem [shape: f32[16,1], index: 3, kind: input, shape index: {}]
  %s4 = inlined_call_operand.vmem [shape: f32[2,16,512], index: 4, kind: output, shape index: {}]
  %s5 = sld [smem:[#allocation0]]
  $region49: #{self_attention_forward.3} parent=0
    _
  %s7 = ssub.s32 1, %s5
  %s8 = scalar_select 0, %s7, %s5
  loop: start=0, step=1, limit=4
  $region2: #{self_attention_forward.3} parent=0 // loop_pre_header
    _
  $region3: #{self_attention_forward.3} parent=0 // loop_header
    %s10 = sphi 0, %s14
    %p11 = scmp.ge.s32.totalorder %s10, 4
    %s17 = sphi 0, %s29
    %s18 = sphi 0, %s25
    %s19 = sphi 0, %s17
    %s20 = sphi 0, %s18
    %s21 = sphi 0, %s19
    %s22 = sphi 0, %s20
    %s34 = sphi 0, %s36
    %s37 = sphi 0, %s34
    %s38 = sphi 0, %s37
    %s54 = sphi 0, %s38
    %s62 = sphi 0, %s64
    %s65 = sphi 0, %s62
    %s66 = sphi 0, %s65
    %s82 = sphi 0, %s66
    %s86 = sphi 0, %s86
    %s88 = sphi 0, %s86
    %s89 = sphi 0, %s88
    %s103 = sphi 0, %s89
    %s107 = sphi 0, %s107
    %s109 = sphi 0, %s107
    %s110 = sphi 0, %s109
    %s124 = sphi 0, %s110
    %s132 = sphi 0, %s134
    %s135 = sphi 0, %s132
    %s136 = sphi 0, %s135
    %s152 = sphi 0, %s136
  $region4: #{self_attention_forward.3} parent=0 // loop_header_branch
    %13 = sbr.rel (%p11) target = $region8
  $region5: #{self_attention_forward.3} parent=0 // loop_body
    %s15 = ssub.s32 %s10, 1
    %s16 = ssub.s32 %s10, 2
    %s23 = sadd.s32 1, %s18
    %p24 = scmp.ge.s32.totalorder %s23, 1
    %s25 = scalar_select %p24, 0, %s23
    %s26 = sadd.s32 1, %s17
    %s27 = scalar_select %p24, %s26, %s17
    %p28 = scmp.ge.s32.totalorder %s27, 2
    %s29 = scalar_select %p28, 0, %s27
    %s30 = ssub.s32 %s17, %s29
    %s31 = ssub.s32 %s18, %s25
    %s32 = sor.u32 %s30, %s31
    %p33 = scmp.eq.s32.totalorder %s32, 0
    %s35 = sadd.s32 %s34, 1
    %s36 = scalar_select %p33, %s34, %s35
    %p39 = pneg %p33
    %p40 = scmp.eq.s32.totalorder %s10, 1
    %p41 = por %p39, %p40
    %p42 = scmp.ne.s32.totalorder %s34, %s37
    %p43 = scmp.eq.s32.totalorder %s10, 0
    %p44 = por %p42, %p43
    %p45 = scmp.ne.s32.totalorder %s34, %s37
    %p46 = scmp.eq.s32.totalorder %s15, 1
    %p47 = por %p45, %p46
    %p48 = scmp.ne.s32.totalorder %s37, %s38
    %p49 = scmp.eq.s32.totalorder %s15, 0
    %p50 = por %p48, %p49
    %p51 = scmp.ne.s32.totalorder %s37, %s38
    %p52 = scmp.eq.s32.totalorder %s16, 1
    %p53 = por %p51, %p52
    %p55 = scmp.ne.s32.totalorder %s38, %s54
    %p56 = scmp.eq.s32.totalorder %s16, 0
    %p57 = por %p55, %p56
    %s58 = ssub.s32 %s17, %s29
    %s59 = ssub.s32 %s18, %s25
    %s60 = sor.u32 %s58, %s59
    %p61 = scmp.eq.s32.totalorder %s60, 0
    %s63 = sadd.s32 %s62, 1
    %s64 = scalar_select %p61, %s62, %s63
    %p67 = pneg %p61
    %p68 = scmp.eq.s32.totalorder %s10, 1
    %p69 = por %p67, %p68
    %p70 = scmp.ne.s32.totalorder %s62, %s65
    %p71 = scmp.eq.s32.totalorder %s10, 0
    %p72 = por %p70, %p71
    %p73 = scmp.ne.s32.totalorder %s62, %s65
    %p74 = scmp.eq.s32.totalorder %s15, 1
    %p75 = por %p73, %p74
    %p76 = scmp.ne.s32.totalorder %s65, %s66
    %p77 = scmp.eq.s32.totalorder %s15, 0
    %p78 = por %p76, %p77
    %p79 = scmp.ne.s32.totalorder %s65, %s66
    %p80 = scmp.eq.s32.totalorder %s16, 1
    %p81 = por %p79, %p80
    %p83 = scmp.ne.s32.totalorder %s66, %s82
    %p84 = scmp.eq.s32.totalorder %s16, 0
    %p85 = por %p83, %p84
    %s87 = sadd.s32 %s86, 1
    %p90 = scmp.eq.s32.totalorder %s10, 1
    %p91 = scmp.ne.s32.totalorder %s86, %s88
    %p92 = scmp.eq.s32.totalorder %s10, 0
    %p93 = por %p91, %p92
    %p94 = scmp.ne.s32.totalorder %s86, %s88
    %p95 = scmp.eq.s32.totalorder %s15, 1
    %p96 = por %p94, %p95
    %p97 = scmp.ne.s32.totalorder %s88, %s89
    %p98 = scmp.eq.s32.totalorder %s15, 0
    %p99 = por %p97, %p98
    %p100 = scmp.ne.s32.totalorder %s88, %s89
    %p101 = scmp.eq.s32.totalorder %s16, 1
    %p102 = por %p100, %p101
    %p104 = scmp.ne.s32.totalorder %s89, %s103
    %p105 = scmp.eq.s32.totalorder %s16, 0
    %p106 = por %p104, %p105
    %s108 = sadd.s32 %s107, 1
    %p111 = scmp.eq.s32.totalorder %s10, 1
    %p112 = scmp.ne.s32.totalorder %s107, %s109
    %p113 = scmp.eq.s32.totalorder %s10, 0
    %p114 = por %p112, %p113
    %p115 = scmp.ne.s32.totalorder %s107, %s109
    %p116 = scmp.eq.s32.totalorder %s15, 1
    %p117 = por %p115, %p116
    %p118 = scmp.ne.s32.totalorder %s109, %s110
    %p119 = scmp.eq.s32.totalorder %s15, 0
    %p120 = por %p118, %p119
    %p121 = scmp.ne.s32.totalorder %s109, %s110
    %p122 = scmp.eq.s32.totalorder %s16, 1
    %p123 = por %p121, %p122
    %p125 = scmp.ne.s32.totalorder %s110, %s124
    %p126 = scmp.eq.s32.totalorder %s16, 0
    %p127 = por %p125, %p126
    %s128 = ssub.s32 %s17, %s29
    %s129 = ssub.s32 %s18, %s25
    %s130 = sor.u32 %s128, %s129
    %p131 = scmp.eq.s32.totalorder %s130, 0
    %s133 = sadd.s32 %s132, 1
    %s134 = scalar_select %p131, %s132, %s133
    %p137 = pneg %p131
    %p138 = scmp.eq.s32.totalorder %s10, 1
    %p139 = por %p137, %p138
    %p140 = scmp.ne.s32.totalorder %s132, %s135
    %p141 = scmp.eq.s32.totalorder %s10, 0
    %p142 = por %p140, %p141
    %p143 = scmp.ne.s32.totalorder %s132, %s135
    %p144 = scmp.eq.s32.totalorder %s15, 1
    %p145 = por %p143, %p144
    %p146 = scmp.ne.s32.totalorder %s135, %s136
    %p147 = scmp.eq.s32.totalorder %s15, 0
    %p148 = por %p146, %p147
    %p149 = scmp.ne.s32.totalorder %s135, %s136
    %p150 = scmp.eq.s32.totalorder %s16, 1
    %p151 = por %p149, %p150
    %p153 = scmp.ne.s32.totalorder %s136, %s152
    %p154 = scmp.eq.s32.totalorder %s16, 0
    %p155 = por %p153, %p154
    %p156 = scmp.le.s32.totalorder 1, %s10
    %p157 = scmp.lt.s32.totalorder %s10, 3
    %p158 = pnand %p156, %p157
    %p159 = pneg %p158
    // Predicated region
    $region9: #{self_attention_forward.3} parent=5 // pred_check
      _
    $region10: #{self_attention_forward.3} parent=5 // pred_check_branch
      %161 = sbr.rel (%p158) target = $region12
    $region11: #{self_attention_forward.3} parent=5 // pred_region
      %s162 = ssub.s32 %s10, 1
      // Predicated region
      $region13: #{self_attention_forward.3} parent=11 // pred_check
        %p163 = pneg %p99
      $region14: #{self_attention_forward.3} parent=11 // pred_check_branch
        %165 = sbr.rel (%p163) target = $region16
      $region15: #{self_attention_forward.3} parent=11 // pred_region
        _
      $region16: #{self_attention_forward.3} parent=11 // pred_fallthru
        _
      // Predicated region
      $region17: #{self_attention_forward.3} parent=11 // pred_check
        %p166 = pneg %p120
      $region18: #{self_attention_forward.3} parent=11 // pred_check_branch
        %168 = sbr.rel (%p166) target = $region20
      $region19: #{self_attention_forward.3} parent=11 // pred_region
        _
      $region20: #{self_attention_forward.3} parent=11 // pred_fallthru
        _
    $region12: #{self_attention_forward.3} parent=5 // pred_fallthru
      _
    %p169 = scmp.lt.s32.totalorder %s10, 2
    // Predicated region
    $region21: #{self_attention_forward.3} parent=5 // pred_check
      %p170 = pneg %p169
    $region22: #{self_attention_forward.3} parent=5 // pred_check_branch
      %172 = sbr.rel (%p170) target = $region24
    $region23: #{self_attention_forward.3} parent=5 // pred_region
      // Predicated region
      $region25: #{self_attention_forward.3} parent=23 // pred_check
        %p173 = pneg %p44
      $region26: #{self_attention_forward.3} parent=23 // pred_check_branch
        %175 = sbr.rel (%p173) target = $region28
      $region27: #{self_attention_forward.3} parent=23 // pred_region
        %s176 = smul.u32 4, %s18
        %p177 = scmp.lt.s32.totalorder %s17, 1
        %s178 = scalar_select %p177, %s17, 1
        %p179 = scmp.lt.s32.totalorder %s176, 3
        %s180 = scalar_select %p179, %s176, 3
        %s181 = smul.addr %s178, 8
        %s182 = sadd.s32 %s180, %s181
        %s183 = smul.addr %s182, 8
        %s184 = scalar_lea.vmem %s0, %s183
        %s185 = smul.u32 4, %s18
      $region28: #{self_attention_forward.3} parent=23 // pred_fallthru
        _
      // Predicated region
      $region29: #{self_attention_forward.3} parent=23 // pred_check
        %p186 = pneg %p72
      $region30: #{self_attention_forward.3} parent=23 // pred_check_branch
        %188 = sbr.rel (%p186) target = $region32
      $region31: #{self_attention_forward.3} parent=23 // pred_region
        %s189 = smul.u32 4, %s18
        %p190 = scmp.lt.s32.totalorder %s17, 1
        %s191 = scalar_select %p190, %s17, 1
        %p192 = scmp.lt.s32.totalorder %s189, 3
        %s193 = scalar_select %p192, %s189, 3
        %s194 = smul.addr %s191, 8
        %s195 = sadd.s32 %s193, %s194
        %s196 = smul.addr %s195, 4
        %s197 = scalar_lea.vmem %s1, %s196
        %s198 = smul.u32 4, %s18
      $region32: #{self_attention_forward.3} parent=23 // pred_fallthru
        _
    $region24: #{self_attention_forward.3} parent=5 // pred_fallthru
      _
    %p199 = scmp.le.s32.totalorder 1, %s10
    %p200 = scmp.lt.s32.totalorder %s10, 3
    %p201 = pnand %p199, %p200
    %p202 = pneg %p201
    // Predicated region
    $region33: #{self_attention_forward.3} parent=5 // pred_check
      _
    $region34: #{self_attention_forward.3} parent=5 // pred_check_branch
      %204 = sbr.rel (%p201) target = $region36
    $region35: #{self_attention_forward.3} parent=5 // pred_region
      %s205 = ssub.s32 %s10, 1
      %s206 = smul.u32 4, %s20
      %p207 = scmp.lt.s32.totalorder %s19, 1
      %s208 = scalar_select %p207, %s19, 1
      %p209 = scmp.lt.s32.totalorder %s206, 3
      %s210 = scalar_select %p209, %s206, 3
      %s211 = smul.addr %s208, 8
      %s212 = sadd.s32 %s210, %s211
      %s213 = smul.addr %s212, 8
      %s214 = scalar_lea.vmem %s0, %s213
      %p215 = pneg %p50
      %p216 = pneg %p47
      %s217 = smul.u32 4, %s20
      %p218 = scmp.lt.s32.totalorder %s19, 1
      %s219 = scalar_select %p218, %s19, 1
      %p220 = scmp.lt.s32.totalorder %s217, 3
      %s221 = scalar_select %p220, %s217, 3
      %s222 = smul.addr %s219, 8
      %s223 = sadd.s32 %s221, %s222
      %s224 = smul.addr %s223, 4
      %s225 = scalar_lea.vmem %s1, %s224
      %p226 = pneg %p78
      %p227 = pneg %p75
      %p228 = pneg %p99
      %p229 = pneg %p96
      %p230 = pneg %p120
      %p231 = pneg %p117
      %p232 = pneg %p148
      %p233 = pneg %p145
      %s234 = smul.u32 4, %s20
      %p235 = scmp.lt.s32.totalorder %s19, 1
      %s236 = scalar_select %p235, %s19, 1
      %p237 = scmp.lt.s32.totalorder %s234, 3
      %s238 = scalar_select %p237, %s234, 3
      %s239 = smul.addr %s236, 8
      %s240 = sadd.s32 %s238, %s239
      %s241 = smul.addr %s240, 8
      %s242 = scalar_lea.vmem %s4, %s241
      %s243 = smul.u32 4, %s20
      %p244 = scmp.lt.s32.totalorder %s19, 1
      %s245 = scalar_select %p244, %s19, 1
      %p246 = scmp.lt.s32.totalorder %s243, 3
      %s247 = scalar_select %p246, %s243, 3
      %s248 = smul.addr %s245, 8
      %s249 = sadd.s32 %s247, %s248
      %s250 = smul.addr %s249, 8
      %s251 = scalar_lea.vmem %s0, %s250
      %s252 = smul.u32 4, %s20
      %s253 = smul.u32 4, %s20
      %p254 = scmp.lt.s32.totalorder %s19, 1
      %s255 = scalar_select %p254, %s19, 1
      %p256 = scmp.lt.s32.totalorder %s253, 3
      %s257 = scalar_select %p256, %s253, 3
      %s258 = smul.addr %s255, 8
      %s259 = sadd.s32 %s257, %s258
      %s260 = smul.addr %s259, 4
      %s261 = scalar_lea.vmem %s1, %s260
      %s262 = smul.u32 4, %s20
      %s263 = smul.u32 4, %s20
      %p264 = scmp.lt.s32.totalorder %s19, 1
      %s265 = scalar_select %p264, %s19, 1
      %p266 = scmp.lt.s32.totalorder %s263, 3
      %s267 = scalar_select %p266, %s263, 3
      %s268 = smul.addr %s265, 8
      %s269 = sadd.s32 %s267, %s268
      %s270 = smul.addr %s269, 8
      %s271 = scalar_lea.vmem %s4, %s270
      %s272 = smul.u32 4, %s20
      %v273 = vld [vmem:[%s261] sm:$0xff]
      %v274 = vld [vmem:[%s261 + $0x8] sm:$0xff]
      %v275 = vld [vmem:[%s261 + $0x10] sm:$0xff]
      %v276 = vld [vmem:[%s261 + $0x18] sm:$0xff]
      %v277 = vunpack.c.l.bf16 %v273
      %v278 = vunpack.c.h.bf16 %v273
      %v279 = vunpack.c.l.bf16 %v274
      %v280 = vunpack.c.h.bf16 %v274
      %v281 = vunpack.c.l.bf16 %v275
      %v282 = vunpack.c.h.bf16 %v275
      %v283 = vunpack.c.l.bf16 %v276
      %v284 = vunpack.c.h.bf16 %v276
      %v285 = vld [vmem:[%s251] sm:$0xff]
      %v286 = vld [vmem:[%s251 + $0x8] sm:$0xff]
      %v287 = vld [vmem:[%s251 + $0x10] sm:$0xff]
      %v288 = vld [vmem:[%s251 + $0x18] sm:$0xff]
      %v289 = vld [vmem:[%s251 + $0x20] sm:$0xff]
      %v290 = vld [vmem:[%s251 + $0x28] sm:$0xff]
      %v291 = vld [vmem:[%s251 + $0x30] sm:$0xff]
      %v292 = vld [vmem:[%s251 + $0x38] sm:$0xff]
      %v293 = vld [vmem:[%s2] sm:$0xff]
      %v294 = vld [vmem:[%s2 + $0x8] sm:$0xff]
      %296 = vset.pattern.permute.xlu0 0
      %297 = vperm.xlu0 %296, %v293
      %v298 = vpop.permute.xlu0 %297
      %301 = vset.pattern.permute.xlu0 0
      %302 = vperm.xlu0 %301, %v294
      %v303 = vpop.permute.xlu0 %302
      %v305 = vmul.f32 %v277, %v298
      %v306 = vmul.f32 %v278, %v298
      %v307 = vmul.f32 %v279, %v298
      %v308 = vmul.f32 %v280, %v298
      %v309 = vmul.f32 %v281, %v303
      %v310 = vmul.f32 %v282, %v303
      %v311 = vmul.f32 %v283, %v303
      %v312 = vmul.f32 %v284, %v303
      %v313 = vld [vmem:[%s3] sm:$0xff]
      %v314 = vld [vmem:[%s3 + $0x8] sm:$0xff]
      %316 = vset.pattern.permute.xlu0 0
      %317 = vperm.xlu0 %316, %v313
      %v318 = vpop.permute.xlu0 %317
      %321 = vset.pattern.permute.xlu0 0
      %322 = vperm.xlu0 %321, %v314
      %v323 = vpop.permute.xlu0 %322
      %v325 = vadd.f32 %v305, %v318
      %v326 = vadd.f32 %v306, %v318
      %v327 = vadd.f32 %v307, %v318
      %v328 = vadd.f32 %v308, %v318
      %v329 = vadd.f32 %v309, %v323
      %v330 = vadd.f32 %v310, %v323
      %v331 = vadd.f32 %v311, %v323
      %v332 = vadd.f32 %v312, %v323
      %v333 = vmul.f32 %v325, 1e-05
      %v334 = vmul.f32 %v326, 1e-05
      %v335 = vmul.f32 %v327, 1e-05
      %v336 = vmul.f32 %v328, 1e-05
      %v337 = vmul.f32 %v329, 1e-05
      %v338 = vmul.f32 %v330, 1e-05
      %v339 = vmul.f32 %v331, 1e-05
      %v340 = vmul.f32 %v332, 1e-05
      %v341 = vadd.f32 %v285, %v333
      %v342 = vadd.f32 %v286, %v334
      %v343 = vadd.f32 %v287, %v335
      %v344 = vadd.f32 %v288, %v336
      %v345 = vadd.f32 %v289, %v337
      %v346 = vadd.f32 %v290, %v338
      %v347 = vadd.f32 %v291, %v339
      %v348 = vadd.f32 %v292, %v340
      %349 = vst [vmem:[%s271] sm:$0xff] %v341
      %350 = vst [vmem:[%s271 + $0x8] sm:$0xff] %v342
      %351 = vst [vmem:[%s271 + $0x10] sm:$0xff] %v343
      %352 = vst [vmem:[%s271 + $0x18] sm:$0xff] %v344
      %353 = vst [vmem:[%s271 + $0x20] sm:$0xff] %v345
      %354 = vst [vmem:[%s271 + $0x28] sm:$0xff] %v346
      %355 = vst [vmem:[%s271 + $0x30] sm:$0xff] %v347
      %356 = vst [vmem:[%s271 + $0x38] sm:$0xff] %v348
      %s357 = smul.u32 4, %s20
      %p358 = scmp.lt.s32.totalorder %s19, 1
      %s359 = scalar_select %p358, %s19, 1
      %p360 = scmp.lt.s32.totalorder %s357, 3
      %s361 = scalar_select %p360, %s357, 3
      %s362 = smul.addr %s359, 8
      %s363 = sadd.s32 %s361, %s362
      %s364 = smul.addr %s363, 8
      %s365 = scalar_lea.vmem %s4, %s364
      // Predicated region
      $region37: #{self_attention_forward.3} parent=35 // pred_check
        %p366 = pneg %p145
      $region38: #{self_attention_forward.3} parent=35 // pred_check_branch
        %368 = sbr.rel (%p366) target = $region40
      $region39: #{self_attention_forward.3} parent=35 // pred_region
        %s369 = smul.u32 4, %s20
      $region40: #{self_attention_forward.3} parent=35 // pred_fallthru
        _
    $region36: #{self_attention_forward.3} parent=5 // pred_fallthru
      _
    %p370 = scmp.le.s32.totalorder 2, %s10
    // Predicated region
    $region41: #{self_attention_forward.3} parent=5 // pred_check
      %p371 = pneg %p370
    $region42: #{self_attention_forward.3} parent=5 // pred_check_branch
      %373 = sbr.rel (%p371) target = $region44
    $region43: #{self_attention_forward.3} parent=5 // pred_region
      %s374 = ssub.s32 %s10, 2
      // Predicated region
      $region45: #{self_attention_forward.3} parent=43 // pred_check
        %p375 = pneg %p151
      $region46: #{self_attention_forward.3} parent=43 // pred_check_branch
        %377 = sbr.rel (%p375) target = $region48
      $region47: #{self_attention_forward.3} parent=43 // pred_region
        %s378 = smul.u32 4, %s22
        %p379 = scmp.lt.s32.totalorder %s21, 1
        %s380 = scalar_select %p379, %s21, 1
        %p381 = scmp.lt.s32.totalorder %s378, 3
        %s382 = scalar_select %p381, %s378, 3
        %s383 = smul.addr %s380, 8
        %s384 = sadd.s32 %s382, %s383
        %s385 = smul.addr %s384, 8
        %s386 = scalar_lea.vmem %s4, %s385
      $region48: #{self_attention_forward.3} parent=43 // pred_fallthru
        _
    $region44: #{self_attention_forward.3} parent=5 // pred_fallthru
      _
  $region6: #{self_attention_forward.3} parent=0 // loop_footer
    %s14 = sadd.s32 1, %s10
  $region7: #{self_attention_forward.3} parent=0 // loop_footer_branch
    %9 = sbr.rel target = $region3
  $region8: #{self_attention_forward.3} parent=0 // loop_exit
    _

// kernel: self_attention_forward.2
$region0: #{self_attention_forward.2}
  #allocation0 [shape = 'u32[]', space=smem, size = 0x4, offset = 0x4, fixed_abs, tag = 'smem constant byte address 0x4 - core index']
  #allocation1 [shape = 'u32[72,128]{1,0:T(1,128)}', space=vmem, size = 0x9000, scoped, tag = 'internal scratch']
  #allocation2 [shape = 'f32[16,512]{1,0:T(8,128)}', space=vmem, size = 0x8000, scoped, tag = 'scratch operand']
  %s0 = inlined_call_operand.vmem [shape: bf16[2,512,128], index: 0, kind: input, shape index: {}]
  %s1 = inlined_call_operand.vmem [shape: bf16[2,128,512], index: 1, kind: input, shape index: {}]
  %s2 = inlined_call_operand.vmem [shape: bf16[2,16,512], index: 2, kind: input, shape index: {}]
  %s3 = inlined_call_operand.vmem [shape: f32[1,512], index: 3, kind: input, shape index: {}]
  %s4 = inlined_call_operand.vmem [shape: bf16[2,16,512], index: 4, kind: output, shape index: {0}]
  %s5 = inlined_call_operand.vmem [shape: f32[2,16,1], index: 5, kind: output, shape index: {1}]
  %s6 = inlined_call_operand.vmem [shape: f32[2,16,1], index: 6, kind: output, shape index: {2}]
  %7 = xla_tuple %s4, %s5, %s6
  %s8 = sld [smem:[#allocation0]]
  $region111: #{self_attention_forward.2} parent=0
    _
  %s10 = ssub.s32 1, %s8
  %s11 = scalar_select 0, %s10, %s8
  $region1: #{self_attention_forward.2} parent=0
    #allocation3 [shape = 'u8[16384]{0}', space=vmem, size = 0x4000, scoped, tag = 'input window, operand 2']
    loop: start=0, step=1, limit=6
    $region2: #{self_attention_forward.2} parent=1 // loop_pre_header
      _
    $region3: #{self_attention_forward.2} parent=1 // loop_header
      %s13 = sphi 0, %s17
      %p14 = scmp.ge.s32.totalorder %s13, 6
      %s20 = sphi 0, %s32
      %s21 = sphi 0, %s28
      %s22 = sphi 0, %s20
      %s23 = sphi 0, %s21
      %s24 = sphi 0, %s22
      %s25 = sphi 0, %s23
      %s37 = sphi 0, %s39
      %s40 = sphi 0, %s37
      %s41 = sphi 0, %s40
      %s57 = sphi 0, %s41
      %s63 = sphi 0, %s65
      %s66 = sphi 0, %s63
      %s67 = sphi 0, %s66
      %s83 = sphi 0, %s67
      %s91 = sphi 0, %s93
      %s94 = sphi 0, %s91
      %s95 = sphi 0, %s94
      %s111 = sphi 0, %s95
      %s115 = sphi 0, %s115
      %s117 = sphi 0, %s115
      %s118 = sphi 0, %s117
      %s132 = sphi 0, %s118
      %s138 = sphi 0, %s140
      %s141 = sphi 0, %s138
      %s142 = sphi 0, %s141
      %s158 = sphi 0, %s142
      %s164 = sphi 0, %s166
      %s167 = sphi 0, %s164
      %s168 = sphi 0, %s167
      %s184 = sphi 0, %s168
      %s190 = sphi 0, %s192
      %s193 = sphi 0, %s190
      %s194 = sphi 0, %s193
      %s210 = sphi 0, %s194
    $region4: #{self_attention_forward.2} parent=1 // loop_header_branch
      %16 = sbr.rel (%p14) target = $region8
    $region5: #{self_attention_forward.2} parent=1 // loop_body
      %s18 = ssub.s32 %s13, 1
      %s19 = ssub.s32 %s13, 2
      %s26 = sadd.s32 1, %s21
      %p27 = scmp.ge.s32.totalorder %s26, 2
      %s28 = scalar_select %p27, 0, %s26
      %s29 = sadd.s32 1, %s20
      %s30 = scalar_select %p27, %s29, %s20
      %p31 = scmp.ge.s32.totalorder %s30, 2
      %s32 = scalar_select %p31, 0, %s30
      %s33 = ssub.s32 %s20, %s32
      %s34 = ssub.s32 %s21, %s28
      %s35 = sor.u32 %s33, %s34
      %p36 = scmp.eq.s32.totalorder %s35, 0
      %s38 = sadd.s32 %s37, 1
      %s39 = scalar_select %p36, %s37, %s38
      %p42 = pneg %p36
      %p43 = scmp.eq.s32.totalorder %s13, 3
      %p44 = por %p42, %p43
      %p45 = scmp.ne.s32.totalorder %s37, %s40
      %p46 = scmp.eq.s32.totalorder %s13, 0
      %p47 = por %p45, %p46
      %p48 = scmp.ne.s32.totalorder %s37, %s40
      %p49 = scmp.eq.s32.totalorder %s18, 3
      %p50 = por %p48, %p49
      %p51 = scmp.ne.s32.totalorder %s40, %s41
      %p52 = scmp.eq.s32.totalorder %s18, 0
      %p53 = por %p51, %p52
      %p54 = scmp.ne.s32.totalorder %s40, %s41
      %p55 = scmp.eq.s32.totalorder %s19, 3
      %p56 = por %p54, %p55
      %p58 = scmp.ne.s32.totalorder %s41, %s57
      %p59 = scmp.eq.s32.totalorder %s19, 0
      %p60 = por %p58, %p59
      %s61 = ssub.s32 %s20, %s32
      %p62 = scmp.eq.s32.totalorder %s61, 0
      %s64 = sadd.s32 %s63, 1
      %s65 = scalar_select %p62, %s63, %s64
      %p68 = pneg %p62
      %p69 = scmp.eq.s32.totalorder %s13, 3
      %p70 = por %p68, %p69
      %p71 = scmp.ne.s32.totalorder %s63, %s66
      %p72 = scmp.eq.s32.totalorder %s13, 0
      %p73 = por %p71, %p72
      %p74 = scmp.ne.s32.totalorder %s63, %s66
      %p75 = scmp.eq.s32.totalorder %s18, 3
      %p76 = por %p74, %p75
      %p77 = scmp.ne.s32.totalorder %s66, %s67
      %p78 = scmp.eq.s32.totalorder %s18, 0
      %p79 = por %p77, %p78
      %p80 = scmp.ne.s32.totalorder %s66, %s67
      %p81 = scmp.eq.s32.totalorder %s19, 3
      %p82 = por %p80, %p81
      %p84 = scmp.ne.s32.totalorder %s67, %s83
      %p85 = scmp.eq.s32.totalorder %s19, 0
      %p86 = por %p84, %p85
      %s87 = ssub.s32 %s20, %s32
      %s88 = ssub.s32 %s21, %s28
      %s89 = sor.u32 %s87, %s88
      %p90 = scmp.eq.s32.totalorder %s89, 0
      %s92 = sadd.s32 %s91, 1
      %s93 = scalar_select %p90, %s91, %s92
      %p96 = pneg %p90
      %p97 = scmp.eq.s32.totalorder %s13, 3
      %p98 = por %p96, %p97
      %p99 = scmp.ne.s32.totalorder %s91, %s94
      %p100 = scmp.eq.s32.totalorder %s13, 0
      %p101 = por %p99, %p100
      %p102 = scmp.ne.s32.totalorder %s91, %s94
      %p103 = scmp.eq.s32.totalorder %s18, 3
      %p104 = por %p102, %p103
      %p105 = scmp.ne.s32.totalorder %s94, %s95
      %p106 = scmp.eq.s32.totalorder %s18, 0
      %p107 = por %p105, %p106
      %p108 = scmp.ne.s32.totalorder %s94, %s95
      %p109 = scmp.eq.s32.totalorder %s19, 3
      %p110 = por %p108, %p109
      %p112 = scmp.ne.s32.totalorder %s95, %s111
      %p113 = scmp.eq.s32.totalorder %s19, 0
      %p114 = por %p112, %p113
      %s116 = sadd.s32 %s115, 1
      %p119 = scmp.eq.s32.totalorder %s13, 3
      %p120 = scmp.ne.s32.totalorder %s115, %s117
      %p121 = scmp.eq.s32.totalorder %s13, 0
      %p122 = por %p120, %p121
      %p123 = scmp.ne.s32.totalorder %s115, %s117
      %p124 = scmp.eq.s32.totalorder %s18, 3
      %p125 = por %p123, %p124
      %p126 = scmp.ne.s32.totalorder %s117, %s118
      %p127 = scmp.eq.s32.totalorder %s18, 0
      %p128 = por %p126, %p127
      %p129 = scmp.ne.s32.totalorder %s117, %s118
      %p130 = scmp.eq.s32.totalorder %s19, 3
      %p131 = por %p129, %p130
      %p133 = scmp.ne.s32.totalorder %s118, %s132
      %p134 = scmp.eq.s32.totalorder %s19, 0
      %p135 = por %p133, %p134
      %s136 = ssub.s32 %s20, %s32
      %p137 = scmp.eq.s32.totalorder %s136, 0
      %s139 = sadd.s32 %s138, 1
      %s140 = scalar_select %p137, %s138, %s139
      %p143 = pneg %p137
      %p144 = scmp.eq.s32.totalorder %s13, 3
      %p145 = por %p143, %p144
      %p146 = scmp.ne.s32.totalorder %s138, %s141
      %p147 = scmp.eq.s32.totalorder %s13, 0
      %p148 = por %p146, %p147
      %p149 = scmp.ne.s32.totalorder %s138, %s141
      %p150 = scmp.eq.s32.totalorder %s18, 3
      %p151 = por %p149, %p150
      %p152 = scmp.ne.s32.totalorder %s141, %s142
      %p153 = scmp.eq.s32.totalorder %s18, 0
      %p154 = por %p152, %p153
      %p155 = scmp.ne.s32.totalorder %s141, %s142
      %p156 = scmp.eq.s32.totalorder %s19, 3
      %p157 = por %p155, %p156
      %p159 = scmp.ne.s32.totalorder %s142, %s158
      %p160 = scmp.eq.s32.totalorder %s19, 0
      %p161 = por %p159, %p160
      %s162 = ssub.s32 %s20, %s32
      %p163 = scmp.eq.s32.totalorder %s162, 0
      %s165 = sadd.s32 %s164, 1
      %s166 = scalar_select %p163, %s164, %s165
      %p169 = pneg %p163
      %p170 = scmp.eq.s32.totalorder %s13, 3
      %p171 = por %p169, %p170
      %p172 = scmp.ne.s32.totalorder %s164, %s167
      %p173 = scmp.eq.s32.totalorder %s13, 0
      %p174 = por %p172, %p173
      %p175 = scmp.ne.s32.totalorder %s164, %s167
      %p176 = scmp.eq.s32.totalorder %s18, 3
      %p177 = por %p175, %p176
      %p178 = scmp.ne.s32.totalorder %s167, %s168
      %p179 = scmp.eq.s32.totalorder %s18, 0
      %p180 = por %p178, %p179
      %p181 = scmp.ne.s32.totalorder %s167, %s168
      %p182 = scmp.eq.s32.totalorder %s19, 3
      %p183 = por %p181, %p182
      %p185 = scmp.ne.s32.totalorder %s168, %s184
      %p186 = scmp.eq.s32.totalorder %s19, 0
      %p187 = por %p185, %p186
      %s188 = ssub.s32 %s20, %s32
      %p189 = scmp.eq.s32.totalorder %s188, 0
      %s191 = sadd.s32 %s190, 1
      %s192 = scalar_select %p189, %s190, %s191
      %p195 = pneg %p189
      %p196 = scmp.eq.s32.totalorder %s13, 3
      %p197 = por %p195, %p196
      %p198 = scmp.ne.s32.totalorder %s190, %s193
      %p199 = scmp.eq.s32.totalorder %s13, 0
      %p200 = por %p198, %p199
      %p201 = scmp.ne.s32.totalorder %s190, %s193
      %p202 = scmp.eq.s32.totalorder %s18, 3
      %p203 = por %p201, %p202
      %p204 = scmp.ne.s32.totalorder %s193, %s194
      %p205 = scmp.eq.s32.totalorder %s18, 0
      %p206 = por %p204, %p205
      %p207 = scmp.ne.s32.totalorder %s193, %s194
      %p208 = scmp.eq.s32.totalorder %s19, 3
      %p209 = por %p207, %p208
      %p211 = scmp.ne.s32.totalorder %s194, %s210
      %p212 = scmp.eq.s32.totalorder %s19, 0
      %p213 = por %p211, %p212
      %p214 = scmp.le.s32.totalorder 1, %s13
      %p215 = scmp.lt.s32.totalorder %s13, 5
      %p216 = pnand %p214, %p215
      %p217 = pneg %p216
      // Predicated region
      $region9: #{self_attention_forward.2} parent=5 // pred_check
        _
      $region10: #{self_attention_forward.2} parent=5 // pred_check_branch
        %219 = sbr.rel (%p216) target = $region12
      $region11: #{self_attention_forward.2} parent=5 // pred_region
        %s220 = ssub.s32 %s13, 1
        // Predicated region
        $region13: #{self_attention_forward.2} parent=11 // pred_check
          %p221 = pneg %p128
        $region14: #{self_attention_forward.2} parent=11 // pred_check_branch
          %223 = sbr.rel (%p221) target = $region16
        $region15: #{self_attention_forward.2} parent=11 // pred_region
          _
        $region16: #{self_attention_forward.2} parent=11 // pred_fallthru
          _
      $region12: #{self_attention_forward.2} parent=5 // pred_fallthru
        _
      %p224 = scmp.lt.s32.totalorder %s13, 4
      // Predicated region
      $region17: #{self_attention_forward.2} parent=5 // pred_check
        %p225 = pneg %p224
      $region18: #{self_attention_forward.2} parent=5 // pred_check_branch
        %227 = sbr.rel (%p225) target = $region20
      $region19: #{self_attention_forward.2} parent=5 // pred_region
        // Predicated region
        $region21: #{self_attention_forward.2} parent=19 // pred_check
          %p228 = pneg %p47
        $region22: #{self_attention_forward.2} parent=19 // pred_check_branch
          %230 = sbr.rel (%p228) target = $region24
        $region23: #{self_attention_forward.2} parent=19 // pred_region
          %s231 = smul.u32 32, %s21
          %p232 = scmp.lt.s32.totalorder %s20, 1
          %s233 = scalar_select %p232, %s20, 1
          %p234 = scmp.lt.s32.totalorder %s231, 63
          %s235 = scalar_select %p234, %s231, 63
          %s236 = smul.addr %s233, 64
          %s237 = sadd.s32 %s235, %s236
          %s238 = smul.addr %s237, 4
          %s239 = scalar_lea.vmem %s0, %s238
          %s240 = smul.u32 32, %s21
        $region24: #{self_attention_forward.2} parent=19 // pred_fallthru
          _
        // Predicated region
        $region25: #{self_attention_forward.2} parent=19 // pred_check
          %p241 = pneg %p73
        $region26: #{self_attention_forward.2} parent=19 // pred_check_branch
          %243 = sbr.rel (%p241) target = $region28
        $region27: #{self_attention_forward.2} parent=19 // pred_region
          %p244 = scmp.lt.s32.totalorder %s20, 1
          %s245 = scalar_select %p244, %s20, 1
          %s246 = smul.addr %s245, 64
          %s247 = smul.addr %s246, 4
          %s248 = scalar_lea.vmem %s1, %s247
        $region28: #{self_attention_forward.2} parent=19 // pred_fallthru
          _
        // Predicated region
        $region29: #{self_attention_forward.2} parent=19 // pred_check
          %p249 = pneg %p101
        $region30: #{self_attention_forward.2} parent=19 // pred_check_branch
          %251 = sbr.rel (%p249) target = $region32
        $region31: #{self_attention_forward.2} parent=19 // pred_region
          %s252 = sand.u32 %s91, 1
          %s253 = sand.u32 %s91, 1
          %s254 = smul.addr %s253, 16
          %s255 = scalar_lea.vmem [#allocation3], %s254
          %s256 = smul.u32 2, %s21
          %s257 = smul.addr %s20, 8
          %s258 = sadd.s32 %s256, %s257
          %s259 = smul.addr %s258, 4
          %s260 = scalar_lea.vmem %s2, %s259
          // Predicated region
          $region33: #{self_attention_forward.2} parent=31 // pred_check
            _
          $region34: #{self_attention_forward.2} parent=31 // pred_check_branch
            %262 = sbr.rel (0) target = $region36
          $region35: #{self_attention_forward.2} parent=31 // pred_region
            // Predicated region
            $region37: #{self_attention_forward.2} parent=35 // pred_check
              _
            $region38: #{self_attention_forward.2} parent=35 // pred_check_branch
              %264 = sbr.rel (0) target = $region40
            $region39: #{self_attention_forward.2} parent=35 // pred_region
              // Predicated region
              $region52: #{self_attention_forward.2} parent=39 // pred_check
                _
              $region53: #{self_attention_forward.2} parent=39 // pred_check_branch
                %282 = sbr.rel (0) target = $region55
              $region54: #{self_attention_forward.2} parent=39 // pred_region
                loop: start=0, step=1, limit=1
                $region56: #{self_attention_forward.2} parent=54 // loop_pre_header
                  _
                $region57: #{self_attention_forward.2} parent=54 // loop_header
                  %s284 = sphi 0, %s288
                  %p285 = scmp.ge.s32.totalorder %s284, 1
                  %s289 = sphi %s260, %s260
                  %s290 = sphi %s255, %s255
                $region58: #{self_attention_forward.2} parent=54 // loop_header_branch
                  %287 = sbr.rel (%p285) target = $region62
                $region59: #{self_attention_forward.2} parent=54 // loop_body
                  %v291 = vld [vmem:[%s289] sm:$0xff]
                  %292 = vst [vmem:[%s290] sm:$0xff] %v291
                  %v293 = vld [vmem:[%s289 + $0x10] sm:$0xff]
                  %294 = vst [vmem:[%s290 + $0x8] sm:$0xff] %v293
                $region60: #{self_attention_forward.2} parent=54 // loop_footer
                  %s288 = sadd.s32 1, %s284
                $region61: #{self_attention_forward.2} parent=54 // loop_footer_branch
                  %283 = sbr.rel target = $region57
                $region62: #{self_attention_forward.2} parent=54 // loop_exit
                  _
              $region55: #{self_attention_forward.2} parent=39 // pred_fallthru
                _
              // Predicated region
              $region63: #{self_attention_forward.2} parent=39 // pred_check
                _
              $region64: #{self_attention_forward.2} parent=39 // pred_check_branch
                %296 = sbr.rel target = $region66
              $region65: #{self_attention_forward.2} parent=39 // pred_region
                _
              $region66: #{self_attention_forward.2} parent=39 // pred_fallthru
                _
            $region40: #{self_attention_forward.2} parent=35 // pred_fallthru
              _
            // Predicated region
            $region41: #{self_attention_forward.2} parent=35 // pred_check
              _
            $region42: #{self_attention_forward.2} parent=35 // pred_check_branch
              %266 = sbr.rel target = $region44
            $region43: #{self_attention_forward.2} parent=35 // pred_region
              %s268 = ssub.s32 256, 1
              loop: start=0, step=1, limit=1
              $region45: #{self_attention_forward.2} parent=43 // loop_pre_header
                _
              $region46: #{self_attention_forward.2} parent=43 // loop_header
                %s270 = sphi 0, %s274
                %p271 = scmp.ge.s32.totalorder %s270, 1
                %s275 = sphi %s260, %s260
                %s276 = sphi %s255, %s255
              $region47: #{self_attention_forward.2} parent=43 // loop_header_branch
                %273 = sbr.rel (%p271) target = $region51
              $region48: #{self_attention_forward.2} parent=43 // loop_body
                %v277 = vld [vmem:[%s275] sm:%s268]
                %278 = vst [vmem:[%s276] sm:%s268] %v277
                %v279 = vld [vmem:[%s275 + $0x10] sm:%s268]
                %280 = vst [vmem:[%s276 + $0x8] sm:%s268] %v279
              $region49: #{self_attention_forward.2} parent=43 // loop_footer
                %s274 = sadd.s32 1, %s270
              $region50: #{self_attention_forward.2} parent=43 // loop_footer_branch
                %269 = sbr.rel target = $region46
              $region51: #{self_attention_forward.2} parent=43 // loop_exit
                _
            $region44: #{self_attention_forward.2} parent=35 // pred_fallthru
              _
          $region36: #{self_attention_forward.2} parent=31 // pred_fallthru
            _
          %297 = vnop
        $region32: #{self_attention_forward.2} parent=19 // pred_fallthru
          _
      $region20: #{self_attention_forward.2} parent=5 // pred_fallthru
        _
      %p298 = scmp.le.s32.totalorder 1, %s13
      %p299 = scmp.lt.s32.totalorder %s13, 5
      %p300 = pnand %p298, %p299
      %p301 = pneg %p300
      // Predicated region
      $region67: #{self_attention_forward.2} parent=5 // pred_check
        _
      $region68: #{self_attention_forward.2} parent=5 // pred_check_branch
        %303 = sbr.rel (%p300) target = $region70
      $region69: #{self_attention_forward.2} parent=5 // pred_region
        %s304 = ssub.s32 %s13, 1
        %s305 = sand.u32 %s94, 1
        %s306 = sand.u32 %s94, 1
        %s307 = smul.addr %s306, 16
        %s308 = scalar_lea.vmem [#allocation3], %s307
        // Predicated region
        $region71: #{self_attention_forward.2} parent=69 // pred_check
          %p309 = pneg %p107
        $region72: #{self_attention_forward.2} parent=69 // pred_check_branch
          %311 = sbr.rel (%p309) target = $region74
        $region73: #{self_attention_forward.2} parent=69 // pred_region
          _
        $region74: #{self_attention_forward.2} parent=69 // pred_fallthru
          _
        %s312 = smul.u32 32, %s23
        %p313 = scmp.lt.s32.totalorder %s22, 1
        %s314 = scalar_select %p313, %s22, 1
        %p315 = scmp.lt.s32.totalorder %s312, 63
        %s316 = scalar_select %p315, %s312, 63
        %s317 = smul.addr %s314, 64
        %s318 = sadd.s32 %s316, %s317
        %s319 = smul.addr %s318, 4
        %s320 = scalar_lea.vmem %s0, %s319
        %p321 = pneg %p53
        %p322 = pneg %p50
        %p323 = scmp.lt.s32.totalorder %s22, 1
        %s324 = scalar_select %p323, %s22, 1
        %s325 = smul.addr %s324, 64
        %s326 = smul.addr %s325, 4
        %s327 = scalar_lea.vmem %s1, %s326
        %p328 = pneg %p79
        %p329 = pneg %p76
        %s330 = sand.u32 %s94, 1
        %s331 = sand.u32 %s94, 1
        %s332 = smul.addr %s331, 16
        %s333 = scalar_lea.vmem [#allocation3], %s332
        %p334 = pneg %p107
        %p335 = pneg %p104
        %p336 = pneg %p128
        %p337 = pneg %p125
        %p338 = pneg %p154
        %p339 = pneg %p151
        %p340 = scmp.lt.s32.totalorder %s22, 1
        %s341 = scalar_select %p340, %s22, 1
        %s342 = smul.addr %s341, 8
        %s343 = smul.addr %s342, 4
        %s344 = scalar_lea.vmem %s4, %s343
        %p345 = pneg %p180
        %p346 = pneg %p177
        %p347 = scmp.lt.s32.totalorder %s22, 1
        %s348 = scalar_select %p347, %s22, 1
        %s349 = smul.addr %s348, 2
        %s350 = smul.addr %s349, 8
        %s351 = scalar_lea.vmem %s5, %s350
        %p352 = pneg %p206
        %p353 = pneg %p203
        %p354 = scmp.lt.s32.totalorder %s22, 1
        %s355 = scalar_select %p354, %s22, 1
        %s356 = smul.addr %s355, 2
        %s357 = smul.addr %s356, 8
        %s358 = scalar_lea.vmem %s6, %s357
        %s359 = smul.u32 32, %s23
        %p360 = scmp.lt.s32.totalorder %s22, 1
        %s361 = scalar_select %p360, %s22, 1
        %p362 = scmp.lt.s32.totalorder %s359, 63
        %s363 = scalar_select %p362, %s359, 63
        %s364 = smul.addr %s361, 64
        %s365 = sadd.s32 %s363, %s364
        %s366 = smul.addr %s365, 4
        %s367 = scalar_lea.vmem %s0, %s366
        %s368 = smul.u32 32, %s23
        %p369 = scmp.lt.s32.totalorder %s22, 1
        %s370 = scalar_select %p369, %s22, 1
        %s371 = smul.addr %s370, 64
        %s372 = smul.addr %s371, 4
        %s373 = scalar_lea.vmem %s1, %s372
        %s374 = smul.u32 2, %s23
        %p375 = scmp.lt.s32.totalorder %s22, 1
        %s376 = scalar_select %p375, %s22, 1
        %s377 = smul.addr %s376, 8
        %s378 = smul.addr %s377, 4
        %s379 = scalar_lea.vmem %s4, %s378
        %p380 = scmp.lt.s32.totalorder %s22, 1
        %s381 = scalar_select %p380, %s22, 1
        %s382 = smul.addr %s381, 2
        %s383 = smul.addr %s382, 8
        %s384 = scalar_lea.vmem %s5, %s383
        %p385 = scmp.lt.s32.totalorder %s22, 1
        %s386 = scalar_select %p385, %s22, 1
        %s387 = smul.addr %s386, 2
        %s388 = smul.addr %s387, 8
        %s389 = scalar_lea.vmem %s6, %s388
        %p390 = scmp.eq.s32.totalorder %s23, 0
        // Predicated region
        $region75: #{self_attention_forward.2} parent=69 // pred_check
          %p391 = pneg %p390
        $region76: #{self_attention_forward.2} parent=69 // pred_check_branch
          %393 = sbr.rel (%p391) target = $region78
        $region77: #{self_attention_forward.2} parent=69 // pred_region
          %394 = vst [vmem:[#allocation2] sm:$0xff] 0.0
          %395 = vst [vmem:[#allocation2 + $0x8] sm:$0xff] 0.0
          %396 = vst [vmem:[#allocation2 + $0x10] sm:$0xff] 0.0
          %397 = vst [vmem:[#allocation2 + $0x18] sm:$0xff] 0.0
          %398 = vst [vmem:[#allocation2 + $0x20] sm:$0xff] 0.0
          %399 = vst [vmem:[#allocation2 + $0x28] sm:$0xff] 0.0
          %400 = vst [vmem:[#allocation2 + $0x30] sm:$0xff] 0.0
          %401 = vst [vmem:[#allocation2 + $0x38] sm:$0xff] 0.0
        $region78: #{self_attention_forward.2} parent=69 // pred_fallthru
          _
        %v402 = vld [vmem:[%s367] sm:$0xf]
        %v403 = vld [vmem:[%s367 + $0x4] sm:$0xf]
        %v404 = vld [vmem:[%s367 + $0x8] sm:$0xf]
        %v405 = vld [vmem:[%s367 + $0xc] sm:$0xf]
        %v406 = vld [vmem:[%s367 + $0x10] sm:$0xf]
        %v407 = vld [vmem:[%s367 + $0x14] sm:$0xf]
        %v408 = vld [vmem:[%s367 + $0x18] sm:$0xf]
        %v409 = vld [vmem:[%s367 + $0x1c] sm:$0xf]
        %v410 = vld [vmem:[%s367 + $0x20] sm:$0xf]
        %v411 = vld [vmem:[%s367 + $0x24] sm:$0xf]
        %v412 = vld [vmem:[%s367 + $0x28] sm:$0xf]
        %v413 = vld [vmem:[%s367 + $0x2c] sm:$0xf]
        %v414 = vld [vmem:[%s367 + $0x30] sm:$0xf]
        %v415 = vld [vmem:[%s367 + $0x34] sm:$0xf]
        %v416 = vld [vmem:[%s367 + $0x38] sm:$0xf]
        %v417 = vld [vmem:[%s367 + $0x3c] sm:$0xf]
        %v418 = vld [vmem:[%s367 + $0x40] sm:$0xf]
        %v419 = vld [vmem:[%s367 + $0x44] sm:$0xf]
        %v420 = vld [vmem:[%s367 + $0x48] sm:$0xf]
        %v421 = vld [vmem:[%s367 + $0x4c] sm:$0xf]
        %v422 = vld [vmem:[%s367 + $0x50] sm:$0xf]
        %v423 = vld [vmem:[%s367 + $0x54] sm:$0xf]
        %v424 = vld [vmem:[%s367 + $0x58] sm:$0xf]
        %v425 = vld [vmem:[%s367 + $0x5c] sm:$0xf]
        %v426 = vld [vmem:[%s367 + $0x60] sm:$0xf]
        %v427 = vld [vmem:[%s367 + $0x64] sm:$0xf]
        %v428 = vld [vmem:[%s367 + $0x68] sm:$0xf]
        %v429 = vld [vmem:[%s367 + $0x6c] sm:$0xf]
        %v430 = vld [vmem:[%s367 + $0x70] sm:$0xf]
        %v431 = vld [vmem:[%s367 + $0x74] sm:$0xf]
        %v432 = vld [vmem:[%s367 + $0x78] sm:$0xf]
        %v433 = vld [vmem:[%s367 + $0x7c] sm:$0xf]
        %v434 = vld [vmem:[%s373] sm:$0xff]
        %v435 = vld [vmem:[%s373 + $0x8] sm:$0xff]
        %v436 = vld [vmem:[%s373 + $0x10] sm:$0xff]
        %v437 = vld [vmem:[%s373 + $0x18] sm:$0xff]
        %v438 = vld [vmem:[%s373 + $0x20] sm:$0xff]
        %v439 = vld [vmem:[%s373 + $0x28] sm:$0xff]
        %v440 = vld [vmem:[%s373 + $0x30] sm:$0xff]
        %v441 = vld [vmem:[%s373 + $0x38] sm:$0xff]
        %v442 = vld [vmem:[%s373 + $0x40] sm:$0xff]
        %v443 = vld [vmem:[%s373 + $0x48] sm:$0xff]
        %v444 = vld [vmem:[%s373 + $0x50] sm:$0xff]
        %v445 = vld [vmem:[%s373 + $0x58] sm:$0xff]
        %v446 = vld [vmem:[%s373 + $0x60] sm:$0xff]
        %v447 = vld [vmem:[%s373 + $0x68] sm:$0xff]
        %v448 = vld [vmem:[%s373 + $0x70] sm:$0xff]
        %v449 = vld [vmem:[%s373 + $0x78] sm:$0xff]
        %v450 = vld [vmem:[%s373 + $0x80] sm:$0xff]
        %v451 = vld [vmem:[%s373 + $0x88] sm:$0xff]
        %v452 = vld [vmem:[%s373 + $0x90] sm:$0xff]
        %v453 = vld [vmem:[%s373 + $0x98] sm:$0xff]
        %v454 = vld [vmem:[%s373 + $0xa0] sm:$0xff]
        %v455 = vld [vmem:[%s373 + $0xa8] sm:$0xff]
        %v456 = vld [vmem:[%s373 + $0xb0] sm:$0xff]
        %v457 = vld [vmem:[%s373 + $0xb8] sm:$0xff]
        %v458 = vld [vmem:[%s373 + $0xc0] sm:$0xff]
        %v459 = vld [vmem:[%s373 + $0xc8] sm:$0xff]
        %v460 = vld [vmem:[%s373 + $0xd0] sm:$0xff]
        %v461 = vld [vmem:[%s373 + $0xd8] sm:$0xff]
        %v462 = vld [vmem:[%s373 + $0xe0] sm:$0xff]
        %v463 = vld [vmem:[%s373 + $0xe8] sm:$0xff]
        %v464 = vld [vmem:[%s373 + $0xf0] sm:$0xff]
        %v465 = vld [vmem:[%s373 + $0xf8] sm:$0xff]
        %v466 = vld [vmem:[%s3] sm:$0xf]
        %v468 = vperm.slane %v466, 0
        %v469 = vperm.slane %v466, 1
        %v470 = vperm.slane %v466, 2
        %v471 = vperm.slane %v466, 3
        %v508 = vunpack.c.l.b16 %v402
        %v509 = vunpack.c.l.b16 %v403
        %v510 = vunpack.c.l.b16 %v404
        %v511 = vunpack.c.l.b16 %v405
        %v512 = vunpack.c.l.b16 %v406
        %v513 = vunpack.c.l.b16 %v407
        %v514 = vunpack.c.l.b16 %v408
        %v515 = vunpack.c.l.b16 %v409
        %v516 = vunpack.c.l.b16 %v410
        %v517 = vunpack.c.l.b16 %v411
        %v518 = vunpack.c.l.b16 %v412
        %v519 = vunpack.c.l.b16 %v413
        %v520 = vunpack.c.l.b16 %v414
        %v521 = vunpack.c.l.b16 %v415
        %v522 = vunpack.c.l.b16 %v416
        %v523 = vunpack.c.l.b16 %v417
        %v524 = vunpack.c.l.b16 %v418
        %v525 = vunpack.c.l.b16 %v419
        %v526 = vunpack.c.l.b16 %v420
        %v527 = vunpack.c.l.b16 %v421
        %v528 = vunpack.c.l.b16 %v422
        %v529 = vunpack.c.l.b16 %v423
        %v530 = vunpack.c.l.b16 %v424
        %v531 = vunpack.c.l.b16 %v425
        %v532 = vunpack.c.l.b16 %v426
        %v533 = vunpack.c.l.b16 %v427
        %v534 = vunpack.c.l.b16 %v428
        %v535 = vunpack.c.l.b16 %v429
        %v536 = vunpack.c.l.b16 %v430
        %v537 = vunpack.c.l.b16 %v431
        %v538 = vunpack.c.l.b16 %v432
        %v539 = vunpack.c.l.b16 %v433
        %v540 = vpack.c.b16 %v509, %v508
        %v541 = vpack.c.b16 %v511, %v510
        %v542 = vpack.c.b16 %v513, %v512
        %v543 = vpack.c.b16 %v515, %v514
        %v544 = vpack.c.b16 %v517, %v516
        %v545 = vpack.c.b16 %v519, %v518
        %v546 = vpack.c.b16 %v521, %v520
        %v547 = vpack.c.b16 %v523, %v522
        %v548 = vpack.c.b16 %v525, %v524
        %v549 = vpack.c.b16 %v527, %v526
        %v550 = vpack.c.b16 %v529, %v528
        %v551 = vpack.c.b16 %v531, %v530
        %v552 = vpack.c.b16 %v533, %v532
        %v553 = vpack.c.b16 %v535, %v534
        %v554 = vpack.c.b16 %v537, %v536
        %v555 = vpack.c.b16 %v539, %v538
        %v604 = vunpack.c.l.b16 %v434
        %v605 = vunpack.c.h.b16 %v434
        %v606 = vunpack.c.l.b16 %v435
        %v607 = vunpack.c.h.b16 %v435
        %v608 = vunpack.c.l.b16 %v436
        %v609 = vunpack.c.h.b16 %v436
        %v610 = vunpack.c.l.b16 %v437
        %v611 = vunpack.c.h.b16 %v437
        %v612 = vunpack.c.l.b16 %v438
        %v613 = vunpack.c.h.b16 %v438
        %v614 = vunpack.c.l.b16 %v439
        %v615 = vunpack.c.h.b16 %v439
        %v616 = vunpack.c.l.b16 %v440
        %v617 = vunpack.c.h.b16 %v440
        %v618 = vunpack.c.l.b16 %v441
        %v619 = vunpack.c.h.b16 %v441
        %v620 = vunpack.c.l.b16 %v442
        %v621 = vunpack.c.h.b16 %v442
        %v622 = vunpack.c.l.b16 %v443
        %v623 = vunpack.c.h.b16 %v443
        %v624 = vunpack.c.l.b16 %v444
        %v625 = vunpack.c.h.b16 %v444
        %v626 = vunpack.c.l.b16 %v445
        %v627 = vunpack.c.h.b16 %v445
        %v628 = vunpack.c.l.b16 %v446
        %v629 = vunpack.c.h.b16 %v446
        %v630 = vunpack.c.l.b16 %v447
        %v631 = vunpack.c.h.b16 %v447
        %v632 = vunpack.c.l.b16 %v448
        %v633 = vunpack.c.h.b16 %v448
        %v634 = vunpack.c.l.b16 %v449
        %v635 = vunpack.c.h.b16 %v449
        %v636 = vunpack.c.l.b16 %v450
        %v637 = vunpack.c.h.b16 %v450
        %v638 = vunpack.c.l.b16 %v451
        %v639 = vunpack.c.h.b16 %v451
        %v640 = vunpack.c.l.b16 %v452
        %v641 = vunpack.c.h.b16 %v452
        %v642 = vunpack.c.l.b16 %v453
        %v643 = vunpack.c.h.b16 %v453
        %v644 = vunpack.c.l.b16 %v454
        %v645 = vunpack.c.h.b16 %v454
        %v646 = vunpack.c.l.b16 %v455
        %v647 = vunpack.c.h.b16 %v455
        %v648 = vunpack.c.l.b16 %v456
        %v649 = vunpack.c.h.b16 %v456
        %v650 = vunpack.c.l.b16 %v457
        %v651 = vunpack.c.h.b16 %v457
        %v652 = vunpack.c.l.b16 %v458
        %v653 = vunpack.c.h.b16 %v458
        %v654 = vunpack.c.l.b16 %v459
        %v655 = vunpack.c.h.b16 %v459
        %v656 = vunpack.c.l.b16 %v460
        %v657 = vunpack.c.h.b16 %v460
        %v658 = vunpack.c.l.b16 %v461
        %v659 = vunpack.c.h.b16 %v461
        %v660 = vunpack.c.l.b16 %v462
        %v661 = vunpack.c.h.b16 %v462
        %v662 = vunpack.c.l.b16 %v463
        %v663 = vunpack.c.h.b16 %v463
        %v664 = vunpack.c.l.b16 %v464
        %v665 = vunpack.c.h.b16 %v464
        %v666 = vunpack.c.l.b16 %v465
        %v667 = vunpack.c.h.b16 %v465
        %v668 = vpack.c.b16 %v608, %v604
        %v669 = vpack.c.b16 %v609, %v605
        %v670 = vpack.c.b16 %v610, %v606
        %v671 = vpack.c.b16 %v611, %v607
        %v672 = vpack.c.b16 %v616, %v612
        %v673 = vpack.c.b16 %v617, %v613
        %v674 = vpack.c.b16 %v618, %v614
        %v675 = vpack.c.b16 %v619, %v615
        %v676 = vpack.c.b16 %v624, %v620
        %v677 = vpack.c.b16 %v625, %v621
        %v678 = vpack.c.b16 %v626, %v622
        %v679 = vpack.c.b16 %v627, %v623
        %v680 = vpack.c.b16 %v632, %v628
        %v681 = vpack.c.b16 %v633, %v629
        %v682 = vpack.c.b16 %v634, %v630
        %v683 = vpack.c.b16 %v635, %v631
        %v684 = vpack.c.b16 %v640, %v636
        %v685 = vpack.c.b16 %v641, %v637
        %v686 = vpack.c.b16 %v642, %v638
        %v687 = vpack.c.b16 %v643, %v639
        %v688 = vpack.c.b16 %v648, %v644
        %v689 = vpack.c.b16 %v649, %v645
        %v690 = vpack.c.b16 %v650, %v646
        %v691 = vpack.c.b16 %v651, %v647
        %v692 = vpack.c.b16 %v656, %v652
        %v693 = vpack.c.b16 %v657, %v653
        %v694 = vpack.c.b16 %v658, %v654
        %v695 = vpack.c.b16 %v659, %v655
        %v696 = vpack.c.b16 %v664, %v660
        %v697 = vpack.c.b16 %v665, %v661
        %v698 = vpack.c.b16 %v666, %v662
        %v699 = vpack.c.b16 %v667, %v663
        %732 = vmatpush.bf16.msra.mxu0 %v696
        %733 = vmatpush.bf16.msra.mxu0 %v692
        %734 = vmatpush.bf16.msra.mxu0 %v688
        %735 = vmatpush.bf16.msra.mxu0 %v684
        %736 = vmatpush.bf16.msra.mxu0 %v680
        %737 = vmatpush.bf16.msra.mxu0 %v676
        %738 = vmatpush.bf16.msra.mxu0 %v672
        %739 = vmatpush.bf16.msra.mxu0 %v668
        %740 = vmatmul.bf16.gmra.mxu0 %v540
        %v741 = vpop.f32.mrf.mxu0
        %v742 = vadd.f32 %v468, %v741
        %v743 = vpop.f32.mrf.mxu0
        %v744 = vadd.f32 %v468, %v743
        %745 = vmatmul.bf16.gmra.mxu0 %v541
        %v746 = vpop.f32.mrf.mxu0
        %v747 = vadd.f32 %v468, %v746
        %v748 = vpop.f32.mrf.mxu0
        %v749 = vadd.f32 %v468, %v748
        %750 = vmatmul.bf16.gmra.mxu0 %v542
        %v751 = vpop.f32.mrf.mxu0
        %v752 = vadd.f32 %v468, %v751
        %v753 = vpop.f32.mrf.mxu0
        %v754 = vadd.f32 %v468, %v753
        %755 = vmatmul.bf16.gmra.mxu0 %v543
        %v756 = vpop.f32.mrf.mxu0
        %v757 = vadd.f32 %v468, %v756
        %v758 = vpop.f32.mrf.mxu0
        %v759 = vadd.f32 %v468, %v758
        %760 = vmatmul.bf16.gmra.mxu0 %v544
        %v761 = vpop.f32.mrf.mxu0
        %v762 = vadd.f32 %v468, %v761
        %v763 = vpop.f32.mrf.mxu0
        %v764 = vadd.f32 %v468, %v763
        %765 = vmatmul.bf16.gmra.mxu0 %v545
        %v766 = vpop.f32.mrf.mxu0
        %v767 = vadd.f32 %v468, %v766
        %v768 = vpop.f32.mrf.mxu0
        %v769 = vadd.f32 %v468, %v768
        %770 = vmatmul.bf16.gmra.mxu0 %v546
        %v771 = vpop.f32.mrf.mxu0
        %v772 = vadd.f32 %v468, %v771
        %v773 = vpop.f32.mrf.mxu0
        %v774 = vadd.f32 %v468, %v773
        %775 = vmatmul.bf16.gmra.mxu0 %v547
        %v776 = vpop.f32.mrf.mxu0
        %v777 = vadd.f32 %v468, %v776
        %v778 = vpop.f32.mrf.mxu0
        %v779 = vadd.f32 %v468, %v778
        %780 = vmatmul.bf16.gmra.mxu0 %v548
        %v781 = vpop.f32.mrf.mxu0
        %v782 = vadd.f32 %v468, %v781
        %v783 = vpop.f32.mrf.mxu0
        %v784 = vadd.f32 %v468, %v783
        %785 = vmatmul.bf16.gmra.mxu0 %v549
        %v786 = vpop.f32.mrf.mxu0
        %v787 = vadd.f32 %v468, %v786
        %v788 = vpop.f32.mrf.mxu0
        %v789 = vadd.f32 %v468, %v788
        %790 = vmatmul.bf16.gmra.mxu0 %v550
        %v791 = vpop.f32.mrf.mxu0
        %v792 = vadd.f32 %v468, %v791
        %v793 = vpop.f32.mrf.mxu0
        %v794 = vadd.f32 %v468, %v793
        %795 = vmatmul.bf16.gmra.mxu0 %v551
        %v796 = vpop.f32.mrf.mxu0
        %v797 = vadd.f32 %v468, %v796
        %v798 = vpop.f32.mrf.mxu0
        %v799 = vadd.f32 %v468, %v798
        %800 = vmatmul.bf16.gmra.mxu0 %v552
        %v801 = vpop.f32.mrf.mxu0
        %v802 = vadd.f32 %v468, %v801
        %v803 = vpop.f32.mrf.mxu0
        %v804 = vadd.f32 %v468, %v803
        %805 = vmatmul.bf16.gmra.mxu0 %v553
        %v806 = vpop.f32.mrf.mxu0
        %v807 = vadd.f32 %v468, %v806
        %v808 = vpop.f32.mrf.mxu0
        %v809 = vadd.f32 %v468, %v808
        %810 = vmatmul.bf16.gmra.mxu0 %v554
        %v811 = vpop.f32.mrf.mxu0
        %v812 = vadd.f32 %v468, %v811
        %v813 = vpop.f32.mrf.mxu0
        %v814 = vadd.f32 %v468, %v813
        %815 = vmatmul.bf16.gmra.mxu0 %v555
        %v816 = vpop.f32.mrf.mxu0
        %v817 = vadd.f32 %v468, %v816
        %v818 = vpop.f32.mrf.mxu0
        %v819 = vadd.f32 %v468, %v818
        %820 = vdwg.mxu0
        %821 = vmatpush.bf16.msra.mxu0 %v697
        %822 = vmatpush.bf16.msra.mxu0 %v693
        %823 = vmatpush.bf16.msra.mxu0 %v689
        %824 = vmatpush.bf16.msra.mxu0 %v685
        %825 = vmatpush.bf16.msra.mxu0 %v681
        %826 = vmatpush.bf16.msra.mxu0 %v677
        %827 = vmatpush.bf16.msra.mxu0 %v673
        %828 = vmatpush.bf16.msra.mxu0 %v669
        %829 = vmatmul.bf16.gmra.mxu0 %v540
        %v830 = vpop.f32.mrf.mxu0
        %v831 = vadd.f32 %v469, %v830
        %v832 = vpop.f32.mrf.mxu0
        %v833 = vadd.f32 %v469, %v832
        %834 = vmatmul.bf16.gmra.mxu0 %v541
        %v835 = vpop.f32.mrf.mxu0
        %v836 = vadd.f32 %v469, %v835
        %v837 = vpop.f32.mrf.mxu0
        %v838 = vadd.f32 %v469, %v837
        %839 = vmatmul.bf16.gmra.mxu0 %v542
        %v840 = vpop.f32.mrf.mxu0
        %v841 = vadd.f32 %v469, %v840
        %v842 = vpop.f32.mrf.mxu0
        %v843 = vadd.f32 %v469, %v842
        %844 = vmatmul.bf16.gmra.mxu0 %v543
        %v845 = vpop.f32.mrf.mxu0
        %v846 = vadd.f32 %v469, %v845
        %v847 = vpop.f32.mrf.mxu0
        %v848 = vadd.f32 %v469, %v847
        %849 = vmatmul.bf16.gmra.mxu0 %v544
        %v850 = vpop.f32.mrf.mxu0
        %v851 = vadd.f32 %v469, %v850
        %v852 = vpop.f32.mrf.mxu0
        %v853 = vadd.f32 %v469, %v852
        %854 = vmatmul.bf16.gmra.mxu0 %v545
        %v855 = vpop.f32.mrf.mxu0
        %v856 = vadd.f32 %v469, %v855
        %v857 = vpop.f32.mrf.mxu0
        %v858 = vadd.f32 %v469, %v857
        %859 = vmatmul.bf16.gmra.mxu0 %v546
        %v860 = vpop.f32.mrf.mxu0
        %v861 = vadd.f32 %v469, %v860
        %v862 = vpop.f32.mrf.mxu0
        %v863 = vadd.f32 %v469, %v862
        %864 = vmatmul.bf16.gmra.mxu0 %v547
        %v865 = vpop.f32.mrf.mxu0
        %v866 = vadd.f32 %v469, %v865
        %v867 = vpop.f32.mrf.mxu0
        %v868 = vadd.f32 %v469, %v867
        %869 = vmatmul.bf16.gmra.mxu0 %v548
        %v870 = vpop.f32.mrf.mxu0
        %v871 = vadd.f32 %v469, %v870
        %v872 = vpop.f32.mrf.mxu0
        %v873 = vadd.f32 %v469, %v872
        %874 = vmatmul.bf16.gmra.mxu0 %v549
        %v875 = vpop.f32.mrf.mxu0
        %v876 = vadd.f32 %v469, %v875
        %v877 = vpop.f32.mrf.mxu0
        %v878 = vadd.f32 %v469, %v877
        %879 = vmatmul.bf16.gmra.mxu0 %v550
        %v880 = vpop.f32.mrf.mxu0
        %v881 = vadd.f32 %v469, %v880
        %v882 = vpop.f32.mrf.mxu0
        %v883 = vadd.f32 %v469, %v882
        %884 = vmatmul.bf16.gmra.mxu0 %v551
        %v885 = vpop.f32.mrf.mxu0
        %v886 = vadd.f32 %v469, %v885
        %v887 = vpop.f32.mrf.mxu0
        %v888 = vadd.f32 %v469, %v887
        %889 = vmatmul.bf16.gmra.mxu0 %v552
        %v890 = vpop.f32.mrf.mxu0
        %v891 = vadd.f32 %v469, %v890
        %v892 = vpop.f32.mrf.mxu0
        %v893 = vadd.f32 %v469, %v892
        %894 = vmatmul.bf16.gmra.mxu0 %v553
        %v895 = vpop.f32.mrf.mxu0
        %v896 = vadd.f32 %v469, %v895
        %v897 = vpop.f32.mrf.mxu0
        %v898 = vadd.f32 %v469, %v897
        %899 = vmatmul.bf16.gmra.mxu0 %v554
        %v900 = vpop.f32.mrf.mxu0
        %v901 = vadd.f32 %v469, %v900
        %v902 = vpop.f32.mrf.mxu0
        %v903 = vadd.f32 %v469, %v902
        %904 = vmatmul.bf16.gmra.mxu0 %v555
        %v905 = vpop.f32.mrf.mxu0
        %v906 = vadd.f32 %v469, %v905
        %v907 = vpop.f32.mrf.mxu0
        %v908 = vadd.f32 %v469, %v907
        %909 = vdwg.mxu0
        %910 = vmatpush.bf16.msra.mxu0 %v698
        %911 = vmatpush.bf16.msra.mxu0 %v694
        %912 = vmatpush.bf16.msra.mxu0 %v690
        %913 = vmatpush.bf16.msra.mxu0 %v686
        %914 = vmatpush.bf16.msra.mxu0 %v682
        %915 = vmatpush.bf16.msra.mxu0 %v678
        %916 = vmatpush.bf16.msra.mxu0 %v674
        %917 = vmatpush.bf16.msra.mxu0 %v670
        %918 = vmatmul.bf16.gmra.mxu0 %v540
        %v919 = vpop.f32.mrf.mxu0
        %v920 = vadd.f32 %v470, %v919
        %v921 = vpop.f32.mrf.mxu0
        %v922 = vadd.f32 %v470, %v921
        %923 = vmatmul.bf16.gmra.mxu0 %v541
        %v924 = vpop.f32.mrf.mxu0
        %v925 = vadd.f32 %v470, %v924
        %v926 = vpop.f32.mrf.mxu0
        %v927 = vadd.f32 %v470, %v926
        %928 = vmatmul.bf16.gmra.mxu0 %v542
        %v929 = vpop.f32.mrf.mxu0
        %v930 = vadd.f32 %v470, %v929
        %v931 = vpop.f32.mrf.mxu0
        %v932 = vadd.f32 %v470, %v931
        %933 = vmatmul.bf16.gmra.mxu0 %v543
        %v934 = vpop.f32.mrf.mxu0
        %v935 = vadd.f32 %v470, %v934
        %v936 = vpop.f32.mrf.mxu0
        %v937 = vadd.f32 %v470, %v936
        %938 = vmatmul.bf16.gmra.mxu0 %v544
        %v939 = vpop.f32.mrf.mxu0
        %v940 = vadd.f32 %v470, %v939
        %v941 = vpop.f32.mrf.mxu0
        %v942 = vadd.f32 %v470, %v941
        %943 = vmatmul.bf16.gmra.mxu0 %v545
        %v944 = vpop.f32.mrf.mxu0
        %v945 = vadd.f32 %v470, %v944
        %v946 = vpop.f32.mrf.mxu0
        %v947 = vadd.f32 %v470, %v946
        %948 = vmatmul.bf16.gmra.mxu0 %v546
        %v949 = vpop.f32.mrf.mxu0
        %v950 = vadd.f32 %v470, %v949
        %v951 = vpop.f32.mrf.mxu0
        %v952 = vadd.f32 %v470, %v951
        %953 = vmatmul.bf16.gmra.mxu0 %v547
        %v954 = vpop.f32.mrf.mxu0
        %v955 = vadd.f32 %v470, %v954
        %v956 = vpop.f32.mrf.mxu0
        %v957 = vadd.f32 %v470, %v956
        %958 = vmatmul.bf16.gmra.mxu0 %v548
        %v959 = vpop.f32.mrf.mxu0
        %v960 = vadd.f32 %v470, %v959
        %v961 = vpop.f32.mrf.mxu0
        %v962 = vadd.f32 %v470, %v961
        %963 = vmatmul.bf16.gmra.mxu0 %v549
        %v964 = vpop.f32.mrf.mxu0
        %v965 = vadd.f32 %v470, %v964
        %v966 = vpop.f32.mrf.mxu0
        %v967 = vadd.f32 %v470, %v966
        %968 = vmatmul.bf16.gmra.mxu0 %v550
        %v969 = vpop.f32.mrf.mxu0
        %v970 = vadd.f32 %v470, %v969
        %v971 = vpop.f32.mrf.mxu0
        %v972 = vadd.f32 %v470, %v971
        %973 = vmatmul.bf16.gmra.mxu0 %v551
        %v974 = vpop.f32.mrf.mxu0
        %v975 = vadd.f32 %v470, %v974
        %v976 = vpop.f32.mrf.mxu0
        %v977 = vadd.f32 %v470, %v976
        %978 = vmatmul.bf16.gmra.mxu0 %v552
        %v979 = vpop.f32.mrf.mxu0
        %v980 = vadd.f32 %v470, %v979
        %v981 = vpop.f32.mrf.mxu0
        %v982 = vadd.f32 %v470, %v981
        %983 = vmatmul.bf16.gmra.mxu0 %v553
        %v984 = vpop.f32.mrf.mxu0
        %v985 = vadd.f32 %v470, %v984
        %v986 = vpop.f32.mrf.mxu0
        %v987 = vadd.f32 %v470, %v986
        %988 = vmatmul.bf16.gmra.mxu0 %v554
        %v989 = vpop.f32.mrf.mxu0
        %v990 = vadd.f32 %v470, %v989
        %v991 = vpop.f32.mrf.mxu0
        %v992 = vadd.f32 %v470, %v991
        %993 = vmatmul.bf16.gmra.mxu0 %v555
        %v994 = vpop.f32.mrf.mxu0
        %v995 = vadd.f32 %v470, %v994
        %v996 = vpop.f32.mrf.mxu0
        %v997 = vadd.f32 %v470, %v996
        %998 = vdwg.mxu0
        %999 = vmatpush.bf16.msra.mxu0 %v699
        %1000 = vmatpush.bf16.msra.mxu0 %v695
        %1001 = vmatpush.bf16.msra.mxu0 %v691
        %1002 = vmatpush.bf16.msra.mxu0 %v687
        %1003 = vmatpush.bf16.msra.mxu0 %v683
        %1004 = vmatpush.bf16.msra.mxu0 %v679
        %1005 = vmatpush.bf16.msra.mxu0 %v675
        %1006 = vmatpush.bf16.msra.mxu0 %v671
        %1007 = vmatmul.bf16.gmra.mxu0 %v540
        %v1008 = vpop.f32.mrf.mxu0
        %v1009 = vadd.f32 %v471, %v1008
        %v1010 = vpop.f32.mrf.mxu0
        %v1011 = vadd.f32 %v471, %v1010
        %1012 = vmatmul.bf16.gmra.mxu0 %v541
        %v1013 = vpop.f32.mrf.mxu0
        %v1014 = vadd.f32 %v471, %v1013
        %v1015 = vpop.f32.mrf.mxu0
        %v1016 = vadd.f32 %v471, %v1015
        %1017 = vmatmul.bf16.gmra.mxu0 %v542
        %v1018 = vpop.f32.mrf.mxu0
        %v1019 = vadd.f32 %v471, %v1018
        %v1020 = vpop.f32.mrf.mxu0
        %v1021 = vadd.f32 %v471, %v1020
        %1022 = vmatmul.bf16.gmra.mxu0 %v543
        %v1023 = vpop.f32.mrf.mxu0
        %v1024 = vadd.f32 %v471, %v1023
        %v1025 = vpop.f32.mrf.mxu0
        %v1026 = vadd.f32 %v471, %v1025
        %1027 = vmatmul.bf16.gmra.mxu0 %v544
        %v1028 = vpop.f32.mrf.mxu0
        %v1029 = vadd.f32 %v471, %v1028
        %v1030 = vpop.f32.mrf.mxu0
        %v1031 = vadd.f32 %v471, %v1030
        %1032 = vmatmul.bf16.gmra.mxu0 %v545
        %v1033 = vpop.f32.mrf.mxu0
        %v1034 = vadd.f32 %v471, %v1033
        %v1035 = vpop.f32.mrf.mxu0
        %v1036 = vadd.f32 %v471, %v1035
        %1037 = vmatmul.bf16.gmra.mxu0 %v546
        %v1038 = vpop.f32.mrf.mxu0
        %v1039 = vadd.f32 %v471, %v1038
        %v1040 = vpop.f32.mrf.mxu0
        %v1041 = vadd.f32 %v471, %v1040
        %1042 = vmatmul.bf16.gmra.mxu0 %v547
        %v1043 = vpop.f32.mrf.mxu0
        %v1044 = vadd.f32 %v471, %v1043
        %v1045 = vpop.f32.mrf.mxu0
        %v1046 = vadd.f32 %v471, %v1045
        %1047 = vmatmul.bf16.gmra.mxu0 %v548
        %v1048 = vpop.f32.mrf.mxu0
        %v1049 = vadd.f32 %v471, %v1048
        %v1050 = vpop.f32.mrf.mxu0
        %v1051 = vadd.f32 %v471, %v1050
        %1052 = vmatmul.bf16.gmra.mxu0 %v549
        %v1053 = vpop.f32.mrf.mxu0
        %v1054 = vadd.f32 %v471, %v1053
        %v1055 = vpop.f32.mrf.mxu0
        %v1056 = vadd.f32 %v471, %v1055
        %1057 = vmatmul.bf16.gmra.mxu0 %v550
        %v1058 = vpop.f32.mrf.mxu0
        %v1059 = vadd.f32 %v471, %v1058
        %v1060 = vpop.f32.mrf.mxu0
        %v1061 = vadd.f32 %v471, %v1060
        %1062 = vmatmul.bf16.gmra.mxu0 %v551
        %v1063 = vpop.f32.mrf.mxu0
        %v1064 = vadd.f32 %v471, %v1063
        %v1065 = vpop.f32.mrf.mxu0
        %v1066 = vadd.f32 %v471, %v1065
        %1067 = vmatmul.bf16.gmra.mxu0 %v552
        %v1068 = vpop.f32.mrf.mxu0
        %v1069 = vadd.f32 %v471, %v1068
        %v1070 = vpop.f32.mrf.mxu0
        %v1071 = vadd.f32 %v471, %v1070
        %1072 = vmatmul.bf16.gmra.mxu0 %v553
        %v1073 = vpop.f32.mrf.mxu0
        %v1074 = vadd.f32 %v471, %v1073
        %v1075 = vpop.f32.mrf.mxu0
        %v1076 = vadd.f32 %v471, %v1075
        %1077 = vmatmul.bf16.gmra.mxu0 %v554
        %v1078 = vpop.f32.mrf.mxu0
        %v1079 = vadd.f32 %v471, %v1078
        %v1080 = vpop.f32.mrf.mxu0
        %v1081 = vadd.f32 %v471, %v1080
        %1082 = vmatmul.bf16.gmra.mxu0 %v555
        %v1083 = vpop.f32.mrf.mxu0
        %v1084 = vadd.f32 %v471, %v1083
        %v1085 = vpop.f32.mrf.mxu0
        %v1086 = vadd.f32 %v471, %v1085
        %1087 = vdwg.mxu0
        %v1088 = vmax.f32 %v742, %v831
        %v1089 = vmax.f32 %v1088, %v920
        %v1090 = vmax.f32 %v1089, %v1009
        %1091 = vmax.xlane.f32.xlu0 %v1090
        %v1092 = vpop.xlane.xlu0 %1091
        %v1093 = vmax.f32 %v744, %v833
        %v1094 = vmax.f32 %v1093, %v922
        %v1095 = vmax.f32 %v1094, %v1011
        %1096 = vmax.xlane.f32.xlu0 %v1095
        %v1097 = vpop.xlane.xlu0 %1096
        %v1098 = vmax.f32 %v747, %v836
        %v1099 = vmax.f32 %v1098, %v925
        %v1100 = vmax.f32 %v1099, %v1014
        %1101 = vmax.xlane.f32.xlu0 %v1100
        %v1102 = vpop.xlane.xlu0 %1101
        %v1103 = vmax.f32 %v749, %v838
        %v1104 = vmax.f32 %v1103, %v927
        %v1105 = vmax.f32 %v1104, %v1016
        %1106 = vmax.xlane.f32.xlu0 %v1105
        %v1107 = vpop.xlane.xlu0 %1106
        %v1108 = vmax.f32 %v752, %v841
        %v1109 = vmax.f32 %v1108, %v930
        %v1110 = vmax.f32 %v1109, %v1019
        %1111 = vmax.xlane.f32.xlu0 %v1110
        %v1112 = vpop.xlane.xlu0 %1111
        %v1113 = vmax.f32 %v754, %v843
        %v1114 = vmax.f32 %v1113, %v932
        %v1115 = vmax.f32 %v1114, %v1021
        %1116 = vmax.xlane.f32.xlu0 %v1115
        %v1117 = vpop.xlane.xlu0 %1116
        %v1118 = vmax.f32 %v757, %v846
        %v1119 = vmax.f32 %v1118, %v935
        %v1120 = vmax.f32 %v1119, %v1024
        %1121 = vmax.xlane.f32.xlu0 %v1120
        %v1122 = vpop.xlane.xlu0 %1121
        %v1123 = vmax.f32 %v759, %v848
        %v1124 = vmax.f32 %v1123, %v937
        %v1125 = vmax.f32 %v1124, %v1026
        %1126 = vmax.xlane.f32.xlu0 %v1125
        %v1127 = vpop.xlane.xlu0 %1126
        %v1128 = vmax.f32 %v762, %v851
        %v1129 = vmax.f32 %v1128, %v940
        %v1130 = vmax.f32 %v1129, %v1029
        %1131 = vmax.xlane.f32.xlu0 %v1130
        %v1132 = vpop.xlane.xlu0 %1131
        %v1133 = vmax.f32 %v764, %v853
        %v1134 = vmax.f32 %v1133, %v942
        %v1135 = vmax.f32 %v1134, %v1031
        %1136 = vmax.xlane.f32.xlu0 %v1135
        %v1137 = vpop.xlane.xlu0 %1136
        %v1138 = vmax.f32 %v767, %v856
        %v1139 = vmax.f32 %v1138, %v945
        %v1140 = vmax.f32 %v1139, %v1034
        %1141 = vmax.xlane.f32.xlu0 %v1140
        %v1142 = vpop.xlane.xlu0 %1141
        %v1143 = vmax.f32 %v769, %v858
        %v1144 = vmax.f32 %v1143, %v947
        %v1145 = vmax.f32 %v1144, %v1036
        %1146 = vmax.xlane.f32.xlu0 %v1145
        %v1147 = vpop.xlane.xlu0 %1146
        %v1148 = vmax.f32 %v772, %v861
        %v1149 = vmax.f32 %v1148, %v950
        %v1150 = vmax.f32 %v1149, %v1039
        %1151 = vmax.xlane.f32.xlu0 %v1150
        %v1152 = vpop.xlane.xlu0 %1151
        %v1153 = vmax.f32 %v774, %v863
        %v1154 = vmax.f32 %v1153, %v952
        %v1155 = vmax.f32 %v1154, %v1041
        %1156 = vmax.xlane.f32.xlu0 %v1155
        %v1157 = vpop.xlane.xlu0 %1156
        %v1158 = vmax.f32 %v777, %v866
        %v1159 = vmax.f32 %v1158, %v955
        %v1160 = vmax.f32 %v1159, %v1044
        %1161 = vmax.xlane.f32.xlu0 %v1160
        %v1162 = vpop.xlane.xlu0 %1161
        %v1163 = vmax.f32 %v779, %v868
        %v1164 = vmax.f32 %v1163, %v957
        %v1165 = vmax.f32 %v1164, %v1046
        %1166 = vmax.xlane.f32.xlu0 %v1165
        %v1167 = vpop.xlane.xlu0 %1166
        %v1168 = vmax.f32 %v782, %v871
        %v1169 = vmax.f32 %v1168, %v960
        %v1170 = vmax.f32 %v1169, %v1049
        %1171 = vmax.xlane.f32.xlu0 %v1170
        %v1172 = vpop.xlane.xlu0 %1171
        %v1173 = vmax.f32 %v784, %v873
        %v1174 = vmax.f32 %v1173, %v962
        %v1175 = vmax.f32 %v1174, %v1051
        %1176 = vmax.xlane.f32.xlu0 %v1175
        %v1177 = vpop.xlane.xlu0 %1176
        %v1178 = vmax.f32 %v787, %v876
        %v1179 = vmax.f32 %v1178, %v965
        %v1180 = vmax.f32 %v1179, %v1054
        %1181 = vmax.xlane.f32.xlu0 %v1180
        %v1182 = vpop.xlane.xlu0 %1181
        %v1183 = vmax.f32 %v789, %v878
        %v1184 = vmax.f32 %v1183, %v967
        %v1185 = vmax.f32 %v1184, %v1056
        %1186 = vmax.xlane.f32.xlu0 %v1185
        %v1187 = vpop.xlane.xlu0 %1186
        %v1188 = vmax.f32 %v792, %v881
        %v1189 = vmax.f32 %v1188, %v970
        %v1190 = vmax.f32 %v1189, %v1059
        %1191 = vmax.xlane.f32.xlu0 %v1190
        %v1192 = vpop.xlane.xlu0 %1191
        %v1193 = vmax.f32 %v794, %v883
        %v1194 = vmax.f32 %v1193, %v972
        %v1195 = vmax.f32 %v1194, %v1061
        %1196 = vmax.xlane.f32.xlu0 %v1195
        %v1197 = vpop.xlane.xlu0 %1196
        %v1198 = vmax.f32 %v797, %v886
        %v1199 = vmax.f32 %v1198, %v975
        %v1200 = vmax.f32 %v1199, %v1064
        %1201 = vmax.xlane.f32.xlu0 %v1200
        %v1202 = vpop.xlane.xlu0 %1201
        %v1203 = vmax.f32 %v799, %v888
        %v1204 = vmax.f32 %v1203, %v977
        %v1205 = vmax.f32 %v1204, %v1066
        %1206 = vmax.xlane.f32.xlu0 %v1205
        %v1207 = vpop.xlane.xlu0 %1206
        %v1208 = vmax.f32 %v802, %v891
        %v1209 = vmax.f32 %v1208, %v980
        %v1210 = vmax.f32 %v1209, %v1069
        %1211 = vmax.xlane.f32.xlu0 %v1210
        %v1212 = vpop.xlane.xlu0 %1211
        %v1213 = vmax.f32 %v804, %v893
        %v1214 = vmax.f32 %v1213, %v982
        %v1215 = vmax.f32 %v1214, %v1071
        %1216 = vmax.xlane.f32.xlu0 %v1215
        %v1217 = vpop.xlane.xlu0 %1216
        %v1218 = vmax.f32 %v807, %v896
        %v1219 = vmax.f32 %v1218, %v985
        %v1220 = vmax.f32 %v1219, %v1074
        %1221 = vmax.xlane.f32.xlu0 %v1220
        %v1222 = vpop.xlane.xlu0 %1221
        %v1223 = vmax.f32 %v809, %v898
        %v1224 = vmax.f32 %v1223, %v987
        %v1225 = vmax.f32 %v1224, %v1076
        %1226 = vmax.xlane.f32.xlu0 %v1225
        %v1227 = vpop.xlane.xlu0 %1226
        %v1228 = vmax.f32 %v812, %v901
        %v1229 = vmax.f32 %v1228, %v990
        %v1230 = vmax.f32 %v1229, %v1079
        %1231 = vmax.xlane.f32.xlu0 %v1230
        %v1232 = vpop.xlane.xlu0 %1231
        %v1233 = vmax.f32 %v814, %v903
        %v1234 = vmax.f32 %v1233, %v992
        %v1235 = vmax.f32 %v1234, %v1081
        %1236 = vmax.xlane.f32.xlu0 %v1235
        %v1237 = vpop.xlane.xlu0 %1236
        %v1238 = vmax.f32 %v817, %v906
        %v1239 = vmax.f32 %v1238, %v995
        %v1240 = vmax.f32 %v1239, %v1084
        %1241 = vmax.xlane.f32.xlu0 %v1240
        %v1242 = vpop.xlane.xlu0 %1241
        %v1243 = vmax.f32 %v819, %v908
        %v1244 = vmax.f32 %v1243, %v997
        %v1245 = vmax.f32 %v1244, %v1086
        %1246 = vmax.xlane.f32.xlu0 %v1245
        %v1247 = vpop.xlane.xlu0 %1246
        %v1248 = vsub.f32 %v742, %v1092
        %v1249 = vsub.f32 %v831, %v1092
        %v1250 = vsub.f32 %v920, %v1092
        %v1251 = vsub.f32 %v1009, %v1092
        %v1252 = vsub.f32 %v744, %v1097
        %v1253 = vsub.f32 %v833, %v1097
        %v1254 = vsub.f32 %v922, %v1097
        %v1255 = vsub.f32 %v1011, %v1097
        %v1256 = vsub.f32 %v747, %v1102
        %v1257 = vsub.f32 %v836, %v1102
        %v1258 = vsub.f32 %v925, %v1102
        %v1259 = vsub.f32 %v1014, %v1102
        %v1260 = vsub.f32 %v749, %v1107
        %v1261 = vsub.f32 %v838, %v1107
        %v1262 = vsub.f32 %v927, %v1107
        %v1263 = vsub.f32 %v1016, %v1107
        %v1264 = vsub.f32 %v752, %v1112
        %v1265 = vsub.f32 %v841, %v1112
        %v1266 = vsub.f32 %v930, %v1112
        %v1267 = vsub.f32 %v1019, %v1112
        %v1268 = vsub.f32 %v754, %v1117
        %v1269 = vsub.f32 %v843, %v1117
        %v1270 = vsub.f32 %v932, %v1117
        %v1271 = vsub.f32 %v1021, %v1117
        %v1272 = vsub.f32 %v757, %v1122
        %v1273 = vsub.f32 %v846, %v1122
        %v1274 = vsub.f32 %v935, %v1122
        %v1275 = vsub.f32 %v1024, %v1122
        %v1276 = vsub.f32 %v759, %v1127
        %v1277 = vsub.f32 %v848, %v1127
        %v1278 = vsub.f32 %v937, %v1127
        %v1279 = vsub.f32 %v1026, %v1127
        %v1280 = vsub.f32 %v762, %v1132
        %v1281 = vsub.f32 %v851, %v1132
        %v1282 = vsub.f32 %v940, %v1132
        %v1283 = vsub.f32 %v1029, %v1132
        %v1284 = vsub.f32 %v764, %v1137
        %v1285 = vsub.f32 %v853, %v1137
        %v1286 = vsub.f32 %v942, %v1137
        %v1287 = vsub.f32 %v1031, %v1137
        %v1288 = vsub.f32 %v767, %v1142
        %v1289 = vsub.f32 %v856, %v1142
        %v1290 = vsub.f32 %v945, %v1142
        %v1291 = vsub.f32 %v1034, %v1142
        %v1292 = vsub.f32 %v769, %v1147
        %v1293 = vsub.f32 %v858, %v1147
        %v1294 = vsub.f32 %v947, %v1147
        %v1295 = vsub.f32 %v1036, %v1147
        %v1296 = vsub.f32 %v772, %v1152
        %v1297 = vsub.f32 %v861, %v1152
        %v1298 = vsub.f32 %v950, %v1152
        %v1299 = vsub.f32 %v1039, %v1152
        %v1300 = vsub.f32 %v774, %v1157
        %v1301 = vsub.f32 %v863, %v1157
        %v1302 = vsub.f32 %v952, %v1157
        %v1303 = vsub.f32 %v1041, %v1157
        %v1304 = vsub.f32 %v777, %v1162
        %v1305 = vsub.f32 %v866, %v1162
        %v1306 = vsub.f32 %v955, %v1162
        %v1307 = vsub.f32 %v1044, %v1162
        %v1308 = vsub.f32 %v779, %v1167
        %v1309 = vsub.f32 %v868, %v1167
        %v1310 = vsub.f32 %v957, %v1167
        %v1311 = vsub.f32 %v1046, %v1167
        %v1312 = vsub.f32 %v782, %v1172
        %v1313 = vsub.f32 %v871, %v1172
        %v1314 = vsub.f32 %v960, %v1172
        %v1315 = vsub.f32 %v1049, %v1172
        %v1316 = vsub.f32 %v784, %v1177
        %v1317 = vsub.f32 %v873, %v1177
        %v1318 = vsub.f32 %v962, %v1177
        %v1319 = vsub.f32 %v1051, %v1177
        %v1320 = vsub.f32 %v787, %v1182
        %v1321 = vsub.f32 %v876, %v1182
        %v1322 = vsub.f32 %v965, %v1182
        %v1323 = vsub.f32 %v1054, %v1182
        %v1324 = vsub.f32 %v789, %v1187
        %v1325 = vsub.f32 %v878, %v1187
        %v1326 = vsub.f32 %v967, %v1187
        %v1327 = vsub.f32 %v1056, %v1187
        %v1328 = vsub.f32 %v792, %v1192
        %v1329 = vsub.f32 %v881, %v1192
        %v1330 = vsub.f32 %v970, %v1192
        %v1331 = vsub.f32 %v1059, %v1192
        %v1332 = vsub.f32 %v794, %v1197
        %v1333 = vsub.f32 %v883, %v1197
        %v1334 = vsub.f32 %v972, %v1197
        %v1335 = vsub.f32 %v1061, %v1197
        %v1336 = vsub.f32 %v797, %v1202
        %v1337 = vsub.f32 %v886, %v1202
        %v1338 = vsub.f32 %v975, %v1202
        %v1339 = vsub.f32 %v1064, %v1202
        %v1340 = vsub.f32 %v799, %v1207
        %v1341 = vsub.f32 %v888, %v1207
        %v1342 = vsub.f32 %v977, %v1207
        %v1343 = vsub.f32 %v1066, %v1207
        %v1344 = vsub.f32 %v802, %v1212
        %v1345 = vsub.f32 %v891, %v1212
        %v1346 = vsub.f32 %v980, %v1212
        %v1347 = vsub.f32 %v1069, %v1212
        %v1348 = vsub.f32 %v804, %v1217
        %v1349 = vsub.f32 %v893, %v1217
        %v1350 = vsub.f32 %v982, %v1217
        %v1351 = vsub.f32 %v1071, %v1217
        %v1352 = vsub.f32 %v807, %v1222
        %v1353 = vsub.f32 %v896, %v1222
        %v1354 = vsub.f32 %v985, %v1222
        %v1355 = vsub.f32 %v1074, %v1222
        %v1356 = vsub.f32 %v809, %v1227
        %v1357 = vsub.f32 %v898, %v1227
        %v1358 = vsub.f32 %v987, %v1227
        %v1359 = vsub.f32 %v1076, %v1227
        %v1360 = vsub.f32 %v812, %v1232
        %v1361 = vsub.f32 %v901, %v1232
        %v1362 = vsub.f32 %v990, %v1232
        %v1363 = vsub.f32 %v1079, %v1232
        %v1364 = vsub.f32 %v814, %v1237
        %v1365 = vsub.f32 %v903, %v1237
        %v1366 = vsub.f32 %v992, %v1237
        %v1367 = vsub.f32 %v1081, %v1237
        %v1368 = vsub.f32 %v817, %v1242
        %v1369 = vsub.f32 %v906, %v1242
        %v1370 = vsub.f32 %v995, %v1242
        %v1371 = vsub.f32 %v1084, %v1242
        %v1372 = vsub.f32 %v819, %v1247
        %v1373 = vsub.f32 %v908, %v1247
        %v1374 = vsub.f32 %v997, %v1247
        %v1375 = vsub.f32 %v1086, %v1247
        %v1376 = vmul.f32 %v1248, 1.442695
        %v1377 = vpow.pop %v1376
        %v1378 = vmul.f32 %v1249, 1.442695
        %v1379 = vpow.pop %v1378
        %v1380 = vmul.f32 %v1250, 1.442695
        %v1381 = vpow.pop %v1380
        %v1382 = vmul.f32 %v1251, 1.442695
        %v1383 = vpow.pop %v1382
        %v1384 = vmul.f32 %v1252, 1.442695
        %v1385 = vpow.pop %v1384
        %v1386 = vmul.f32 %v1253, 1.442695
        %v1387 = vpow.pop %v1386
        %v1388 = vmul.f32 %v1254, 1.442695
        %v1389 = vpow.pop %v1388
        %v1390 = vmul.f32 %v1255, 1.442695
        %v1391 = vpow.pop %v1390
        %v1392 = vmul.f32 %v1256, 1.442695
        %v1393 = vpow.pop %v1392
        %v1394 = vmul.f32 %v1257, 1.442695
        %v1395 = vpow.pop %v1394
        %v1396 = vmul.f32 %v1258, 1.442695
        %v1397 = vpow.pop %v1396
        %v1398 = vmul.f32 %v1259, 1.442695
        %v1399 = vpow.pop %v1398
        %v1400 = vmul.f32 %v1260, 1.442695
        %v1401 = vpow.pop %v1400
        %v1402 = vmul.f32 %v1261, 1.442695
        %v1403 = vpow.pop %v1402
        %v1404 = vmul.f32 %v1262, 1.442695
        %v1405 = vpow.pop %v1404
        %v1406 = vmul.f32 %v1263, 1.442695
        %v1407 = vpow.pop %v1406
        %v1408 = vmul.f32 %v1264, 1.442695
        %v1409 = vpow.pop %v1408
        %v1410 = vmul.f32 %v1265, 1.442695
        %v1411 = vpow.pop %v1410
        %v1412 = vmul.f32 %v1266, 1.442695
        %v1413 = vpow.pop %v1412
        %v1414 = vmul.f32 %v1267, 1.442695
        %v1415 = vpow.pop %v1414
        %v1416 = vmul.f32 %v1268, 1.442695
        %v1417 = vpow.pop %v1416
        %v1418 = vmul.f32 %v1269, 1.442695
        %v1419 = vpow.pop %v1418
        %v1420 = vmul.f32 %v1270, 1.442695
        %v1421 = vpow.pop %v1420
        %v1422 = vmul.f32 %v1271, 1.442695
        %v1423 = vpow.pop %v1422
        %v1424 = vmul.f32 %v1272, 1.442695
        %v1425 = vpow.pop %v1424
        %v1426 = vmul.f32 %v1273, 1.442695
        %v1427 = vpow.pop %v1426
        %v1428 = vmul.f32 %v1274, 1.442695
        %v1429 = vpow.pop %v1428
        %v1430 = vmul.f32 %v1275, 1.442695
        %v1431 = vpow.pop %v1430
        %v1432 = vmul.f32 %v1276, 1.442695
        %v1433 = vpow.pop %v1432
        %v1434 = vmul.f32 %v1277, 1.442695
        %v1435 = vpow.pop %v1434
        %v1436 = vmul.f32 %v1278, 1.442695
        %v1437 = vpow.pop %v1436
        %v1438 = vmul.f32 %v1279, 1.442695
        %v1439 = vpow.pop %v1438
        %v1440 = vmul.f32 %v1280, 1.442695
        %v1441 = vpow.pop %v1440
        %v1442 = vmul.f32 %v1281, 1.442695
        %v1443 = vpow.pop %v1442
        %v1444 = vmul.f32 %v1282, 1.442695
        %v1445 = vpow.pop %v1444
        %v1446 = vmul.f32 %v1283, 1.442695
        %v1447 = vpow.pop %v1446
        %v1448 = vmul.f32 %v1284, 1.442695
        %v1449 = vpow.pop %v1448
        %v1450 = vmul.f32 %v1285, 1.442695
        %v1451 = vpow.pop %v1450
        %v1452 = vmul.f32 %v1286, 1.442695
        %v1453 = vpow.pop %v1452
        %v1454 = vmul.f32 %v1287, 1.442695
        %v1455 = vpow.pop %v1454
        %v1456 = vmul.f32 %v1288, 1.442695
        %v1457 = vpow.pop %v1456
        %v1458 = vmul.f32 %v1289, 1.442695
        %v1459 = vpow.pop %v1458
        %v1460 = vmul.f32 %v1290, 1.442695
        %v1461 = vpow.pop %v1460
        %v1462 = vmul.f32 %v1291, 1.442695
        %v1463 = vpow.pop %v1462
        %v1464 = vmul.f32 %v1292, 1.442695
        %v1465 = vpow.pop %v1464
        %v1466 = vmul.f32 %v1293, 1.442695
        %v1467 = vpow.pop %v1466
        %v1468 = vmul.f32 %v1294, 1.442695
        %v1469 = vpow.pop %v1468
        %v1470 = vmul.f32 %v1295, 1.442695
        %v1471 = vpow.pop %v1470
        %v1472 = vmul.f32 %v1296, 1.442695
        %v1473 = vpow.pop %v1472
        %v1474 = vmul.f32 %v1297, 1.442695
        %v1475 = vpow.pop %v1474
        %v1476 = vmul.f32 %v1298, 1.442695
        %v1477 = vpow.pop %v1476
        %v1478 = vmul.f32 %v1299, 1.442695
        %v1479 = vpow.pop %v1478
        %v1480 = vmul.f32 %v1300, 1.442695
        %v1481 = vpow.pop %v1480
        %v1482 = vmul.f32 %v1301, 1.442695
        %v1483 = vpow.pop %v1482
        %v1484 = vmul.f32 %v1302, 1.442695
        %v1485 = vpow.pop %v1484
        %v1486 = vmul.f32 %v1303, 1.442695
        %v1487 = vpow.pop %v1486
        %v1488 = vmul.f32 %v1304, 1.442695
        %v1489 = vpow.pop %v1488
        %v1490 = vmul.f32 %v1305, 1.442695
        %v1491 = vpow.pop %v1490
        %v1492 = vmul.f32 %v1306, 1.442695
        %v1493 = vpow.pop %v1492
        %v1494 = vmul.f32 %v1307, 1.442695
        %v1495 = vpow.pop %v1494
        %v1496 = vmul.f32 %v1308, 1.442695
        %v1497 = vpow.pop %v1496
        %v1498 = vmul.f32 %v1309, 1.442695
        %v1499 = vpow.pop %v1498
        %v1500 = vmul.f32 %v1310, 1.442695
        %v1501 = vpow.pop %v1500
        %v1502 = vmul.f32 %v1311, 1.442695
        %v1503 = vpow.pop %v1502
        %v1504 = vmul.f32 %v1312, 1.442695
        %v1505 = vpow.pop %v1504
        %v1506 = vmul.f32 %v1313, 1.442695
        %v1507 = vpow.pop %v1506
        %v1508 = vmul.f32 %v1314, 1.442695
        %v1509 = vpow.pop %v1508
        %v1510 = vmul.f32 %v1315, 1.442695
        %v1511 = vpow.pop %v1510
        %v1512 = vmul.f32 %v1316, 1.442695
        %v1513 = vpow.pop %v1512
        %v1514 = vmul.f32 %v1317, 1.442695
        %v1515 = vpow.pop %v1514
        %v1516 = vmul.f32 %v1318, 1.442695
        %v1517 = vpow.pop %v1516
        %v1518 = vmul.f32 %v1319, 1.442695
        %v1519 = vpow.pop %v1518
        %v1520 = vmul.f32 %v1320, 1.442695
        %v1521 = vpow.pop %v1520
        %v1522 = vmul.f32 %v1321, 1.442695
        %v1523 = vpow.pop %v1522
        %v1524 = vmul.f32 %v1322, 1.442695
        %v1525 = vpow.pop %v1524
        %v1526 = vmul.f32 %v1323, 1.442695
        %v1527 = vpow.pop %v1526
        %v1528 = vmul.f32 %v1324, 1.442695
        %v1529 = vpow.pop %v1528
        %v1530 = vmul.f32 %v1325, 1.442695
        %v1531 = vpow.pop %v1530
        %v1532 = vmul.f32 %v1326, 1.442695
        %v1533 = vpow.pop %v1532
        %v1534 = vmul.f32 %v1327, 1.442695
        %v1535 = vpow.pop %v1534
        %v1536 = vmul.f32 %v1328, 1.442695
        %v1537 = vpow.pop %v1536
        %v1538 = vmul.f32 %v1329, 1.442695
        %v1539 = vpow.pop %v1538
        %v1540 = vmul.f32 %v1330, 1.442695
        %v1541 = vpow.pop %v1540
        %v1542 = vmul.f32 %v1331, 1.442695
        %v1543 = vpow.pop %v1542
        %v1544 = vmul.f32 %v1332, 1.442695
        %v1545 = vpow.pop %v1544
        %v1546 = vmul.f32 %v1333, 1.442695
        %v1547 = vpow.pop %v1546
        %v1548 = vmul.f32 %v1334, 1.442695
        %v1549 = vpow.pop %v1548
        %v1550 = vmul.f32 %v1335, 1.442695
        %v1551 = vpow.pop %v1550
        %v1552 = vmul.f32 %v1336, 1.442695
        %v1553 = vpow.pop %v1552
        %v1554 = vmul.f32 %v1337, 1.442695
        %v1555 = vpow.pop %v1554
        %v1556 = vmul.f32 %v1338, 1.442695
        %v1557 = vpow.pop %v1556
        %v1558 = vmul.f32 %v1339, 1.442695
        %v1559 = vpow.pop %v1558
        %v1560 = vmul.f32 %v1340, 1.442695
        %v1561 = vpow.pop %v1560
        %v1562 = vmul.f32 %v1341, 1.442695
        %v1563 = vpow.pop %v1562
        %v1564 = vmul.f32 %v1342, 1.442695
        %v1565 = vpow.pop %v1564
        %v1566 = vmul.f32 %v1343, 1.442695
        %v1567 = vpow.pop %v1566
        %v1568 = vmul.f32 %v1344, 1.442695
        %v1569 = vpow.pop %v1568
        %v1570 = vmul.f32 %v1345, 1.442695
        %v1571 = vpow.pop %v1570
        %v1572 = vmul.f32 %v1346, 1.442695
        %v1573 = vpow.pop %v1572
        %v1574 = vmul.f32 %v1347, 1.442695
        %v1575 = vpow.pop %v1574
        %v1576 = vmul.f32 %v1348, 1.442695
        %v1577 = vpow.pop %v1576
        %v1578 = vmul.f32 %v1349, 1.442695
        %v1579 = vpow.pop %v1578
        %v1580 = vmul.f32 %v1350, 1.442695
        %v1581 = vpow.pop %v1580
        %v1582 = vmul.f32 %v1351, 1.442695
        %v1583 = vpow.pop %v1582
        %v1584 = vmul.f32 %v1352, 1.442695
        %v1585 = vpow.pop %v1584
        %v1586 = vmul.f32 %v1353, 1.442695
        %v1587 = vpow.pop %v1586
        %v1588 = vmul.f32 %v1354, 1.442695
        %v1589 = vpow.pop %v1588
        %v1590 = vmul.f32 %v1355, 1.442695
        %v1591 = vpow.pop %v1590
        %v1592 = vmul.f32 %v1356, 1.442695
        %v1593 = vpow.pop %v1592
        %v1594 = vmul.f32 %v1357, 1.442695
        %v1595 = vpow.pop %v1594
        %v1596 = vmul.f32 %v1358, 1.442695
        %v1597 = vpow.pop %v1596
        %v1598 = vmul.f32 %v1359, 1.442695
        %v1599 = vpow.pop %v1598
        %v1600 = vmul.f32 %v1360, 1.442695
        %v1601 = vpow.pop %v1600
        %v1602 = vmul.f32 %v1361, 1.442695
        %v1603 = vpow.pop %v1602
        %v1604 = vmul.f32 %v1362, 1.442695
        %v1605 = vpow.pop %v1604
        %v1606 = vmul.f32 %v1363, 1.442695
        %v1607 = vpow.pop %v1606
        %v1608 = vmul.f32 %v1364, 1.442695
        %v1609 = vpow.pop %v1608
        %v1610 = vmul.f32 %v1365, 1.442695
        %v1611 = vpow.pop %v1610
        %v1612 = vmul.f32 %v1366, 1.442695
        %v1613 = vpow.pop %v1612
        %v1614 = vmul.f32 %v1367, 1.442695
        %v1615 = vpow.pop %v1614
        %v1616 = vmul.f32 %v1368, 1.442695
        %v1617 = vpow.pop %v1616
        %v1618 = vmul.f32 %v1369, 1.442695
        %v1619 = vpow.pop %v1618
        %v1620 = vmul.f32 %v1370, 1.442695
        %v1621 = vpow.pop %v1620
        %v1622 = vmul.f32 %v1371, 1.442695
        %v1623 = vpow.pop %v1622
        %v1624 = vmul.f32 %v1372, 1.442695
        %v1625 = vpow.pop %v1624
        %v1626 = vmul.f32 %v1373, 1.442695
        %v1627 = vpow.pop %v1626
        %v1628 = vmul.f32 %v1374, 1.442695
        %v1629 = vpow.pop %v1628
        %v1630 = vmul.f32 %v1375, 1.442695
        %v1631 = vpow.pop %v1630
        %v1632 = vadd.f32 %v1377, %v1379
        %v1633 = vadd.f32 %v1632, %v1381
        %v1634 = vadd.f32 %v1633, %v1383
        %1635 = vadd.xlane.f32.xlu0 %v1634
        %v1636 = vpop.xlane.xlu0 %1635
        %v1637 = vadd.f32 %v1385, %v1387
        %v1638 = vadd.f32 %v1637, %v1389
        %v1639 = vadd.f32 %v1638, %v1391
        %1640 = vadd.xlane.f32.xlu0 %v1639
        %v1641 = vpop.xlane.xlu0 %1640
        %v1642 = vadd.f32 %v1393, %v1395
        %v1643 = vadd.f32 %v1642, %v1397
        %v1644 = vadd.f32 %v1643, %v1399
        %1645 = vadd.xlane.f32.xlu0 %v1644
        %v1646 = vpop.xlane.xlu0 %1645
        %v1647 = vadd.f32 %v1401, %v1403
        %v1648 = vadd.f32 %v1647, %v1405
        %v1649 = vadd.f32 %v1648, %v1407
        %1650 = vadd.xlane.f32.xlu0 %v1649
        %v1651 = vpop.xlane.xlu0 %1650
        %v1652 = vadd.f32 %v1409, %v1411
        %v1653 = vadd.f32 %v1652, %v1413
        %v1654 = vadd.f32 %v1653, %v1415
        %1655 = vadd.xlane.f32.xlu0 %v1654
        %v1656 = vpop.xlane.xlu0 %1655
        %v1657 = vadd.f32 %v1417, %v1419
        %v1658 = vadd.f32 %v1657, %v1421
        %v1659 = vadd.f32 %v1658, %v1423
        %1660 = vadd.xlane.f32.xlu0 %v1659
        %v1661 = vpop.xlane.xlu0 %1660
        %v1662 = vadd.f32 %v1425, %v1427
        %v1663 = vadd.f32 %v1662, %v1429
        %v1664 = vadd.f32 %v1663, %v1431
        %1665 = vadd.xlane.f32.xlu0 %v1664
        %v1666 = vpop.xlane.xlu0 %1665
        %v1667 = vadd.f32 %v1433, %v1435
        %v1668 = vadd.f32 %v1667, %v1437
        %v1669 = vadd.f32 %v1668, %v1439
        %1670 = vadd.xlane.f32.xlu0 %v1669
        %v1671 = vpop.xlane.xlu0 %1670
        %v1672 = vadd.f32 %v1441, %v1443
        %v1673 = vadd.f32 %v1672, %v1445
        %v1674 = vadd.f32 %v1673, %v1447
        %1675 = vadd.xlane.f32.xlu0 %v1674
        %v1676 = vpop.xlane.xlu0 %1675
        %v1677 = vadd.f32 %v1449, %v1451
        %v1678 = vadd.f32 %v1677, %v1453
        %v1679 = vadd.f32 %v1678, %v1455
        %1680 = vadd.xlane.f32.xlu0 %v1679
        %v1681 = vpop.xlane.xlu0 %1680
        %v1682 = vadd.f32 %v1457, %v1459
        %v1683 = vadd.f32 %v1682, %v1461
        %v1684 = vadd.f32 %v1683, %v1463
        %1685 = vadd.xlane.f32.xlu0 %v1684
        %v1686 = vpop.xlane.xlu0 %1685
        %v1687 = vadd.f32 %v1465, %v1467
        %v1688 = vadd.f32 %v1687, %v1469
        %v1689 = vadd.f32 %v1688, %v1471
        %1690 = vadd.xlane.f32.xlu0 %v1689
        %v1691 = vpop.xlane.xlu0 %1690
        %v1692 = vadd.f32 %v1473, %v1475
        %v1693 = vadd.f32 %v1692, %v1477
        %v1694 = vadd.f32 %v1693, %v1479
        %1695 = vadd.xlane.f32.xlu0 %v1694
        %v1696 = vpop.xlane.xlu0 %1695
        %v1697 = vadd.f32 %v1481, %v1483
        %v1698 = vadd.f32 %v1697, %v1485
        %v1699 = vadd.f32 %v1698, %v1487
        %1700 = vadd.xlane.f32.xlu0 %v1699
        %v1701 = vpop.xlane.xlu0 %1700
        %v1702 = vadd.f32 %v1489, %v1491
        %v1703 = vadd.f32 %v1702, %v1493
        %v1704 = vadd.f32 %v1703, %v1495
        %1705 = vadd.xlane.f32.xlu0 %v1704
        %v1706 = vpop.xlane.xlu0 %1705
        %v1707 = vadd.f32 %v1497, %v1499
        %v1708 = vadd.f32 %v1707, %v1501
        %v1709 = vadd.f32 %v1708, %v1503
        %1710 = vadd.xlane.f32.xlu0 %v1709
        %v1711 = vpop.xlane.xlu0 %1710
        %v1712 = vadd.f32 %v1505, %v1507
        %v1713 = vadd.f32 %v1712, %v1509
        %v1714 = vadd.f32 %v1713, %v1511
        %1715 = vadd.xlane.f32.xlu0 %v1714
        %v1716 = vpop.xlane.xlu0 %1715
        %v1717 = vadd.f32 %v1513, %v1515
        %v1718 = vadd.f32 %v1717, %v1517
        %v1719 = vadd.f32 %v1718, %v1519
        %1720 = vadd.xlane.f32.xlu0 %v1719
        %v1721 = vpop.xlane.xlu0 %1720
        %v1722 = vadd.f32 %v1521, %v1523
        %v1723 = vadd.f32 %v1722, %v1525
        %v1724 = vadd.f32 %v1723, %v1527
        %1725 = vadd.xlane.f32.xlu0 %v1724
        %v1726 = vpop.xlane.xlu0 %1725
        %v1727 = vadd.f32 %v1529, %v1531
        %v1728 = vadd.f32 %v1727, %v1533
        %v1729 = vadd.f32 %v1728, %v1535
        %1730 = vadd.xlane.f32.xlu0 %v1729
        %v1731 = vpop.xlane.xlu0 %1730
        %v1732 = vadd.f32 %v1537, %v1539
        %v1733 = vadd.f32 %v1732, %v1541
        %v1734 = vadd.f32 %v1733, %v1543
        %1735 = vadd.xlane.f32.xlu0 %v1734
        %v1736 = vpop.xlane.xlu0 %1735
        %v1737 = vadd.f32 %v1545, %v1547
        %v1738 = vadd.f32 %v1737, %v1549
        %v1739 = vadd.f32 %v1738, %v1551
        %1740 = vadd.xlane.f32.xlu0 %v1739
        %v1741 = vpop.xlane.xlu0 %1740
        %v1742 = vadd.f32 %v1553, %v1555
        %v1743 = vadd.f32 %v1742, %v1557
        %v1744 = vadd.f32 %v1743, %v1559
        %1745 = vadd.xlane.f32.xlu0 %v1744
        %v1746 = vpop.xlane.xlu0 %1745
        %v1747 = vadd.f32 %v1561, %v1563
        %v1748 = vadd.f32 %v1747, %v1565
        %v1749 = vadd.f32 %v1748, %v1567
        %1750 = vadd.xlane.f32.xlu0 %v1749
        %v1751 = vpop.xlane.xlu0 %1750
        %v1752 = vadd.f32 %v1569, %v1571
        %v1753 = vadd.f32 %v1752, %v1573
        %v1754 = vadd.f32 %v1753, %v1575
        %1755 = vadd.xlane.f32.xlu0 %v1754
        %v1756 = vpop.xlane.xlu0 %1755
        %v1757 = vadd.f32 %v1577, %v1579
        %v1758 = vadd.f32 %v1757, %v1581
        %v1759 = vadd.f32 %v1758, %v1583
        %1760 = vadd.xlane.f32.xlu0 %v1759
        %v1761 = vpop.xlane.xlu0 %1760
        %v1762 = vadd.f32 %v1585, %v1587
        %v1763 = vadd.f32 %v1762, %v1589
        %v1764 = vadd.f32 %v1763, %v1591
        %1765 = vadd.xlane.f32.xlu0 %v1764
        %v1766 = vpop.xlane.xlu0 %1765
        %v1767 = vadd.f32 %v1593, %v1595
        %v1768 = vadd.f32 %v1767, %v1597
        %v1769 = vadd.f32 %v1768, %v1599
        %1770 = vadd.xlane.f32.xlu0 %v1769
        %v1771 = vpop.xlane.xlu0 %1770
        %v1772 = vadd.f32 %v1601, %v1603
        %v1773 = vadd.f32 %v1772, %v1605
        %v1774 = vadd.f32 %v1773, %v1607
        %1775 = vadd.xlane.f32.xlu0 %v1774
        %v1776 = vpop.xlane.xlu0 %1775
        %v1777 = vadd.f32 %v1609, %v1611
        %v1778 = vadd.f32 %v1777, %v1613
        %v1779 = vadd.f32 %v1778, %v1615
        %1780 = vadd.xlane.f32.xlu0 %v1779
        %v1781 = vpop.xlane.xlu0 %1780
        %v1782 = vadd.f32 %v1617, %v1619
        %v1783 = vadd.f32 %v1782, %v1621
        %v1784 = vadd.f32 %v1783, %v1623
        %1785 = vadd.xlane.f32.xlu0 %v1784
        %v1786 = vpop.xlane.xlu0 %1785
        %v1787 = vadd.f32 %v1625, %v1627
        %v1788 = vadd.f32 %v1787, %v1629
        %v1789 = vadd.f32 %v1788, %v1631
        %1790 = vadd.xlane.f32.xlu0 %v1789
        %v1791 = vpop.xlane.xlu0 %1790
        %v1792 = vrcp.pop %v1636
        %v1793 = vrcp.pop %v1641
        %v1794 = vrcp.pop %v1646
        %v1795 = vrcp.pop %v1651
        %v1796 = vrcp.pop %v1656
        %v1797 = vrcp.pop %v1661
        %v1798 = vrcp.pop %v1666
        %v1799 = vrcp.pop %v1671
        %v1800 = vrcp.pop %v1676
        %v1801 = vrcp.pop %v1681
        %v1802 = vrcp.pop %v1686
        %v1803 = vrcp.pop %v1691
        %v1804 = vrcp.pop %v1696
        %v1805 = vrcp.pop %v1701
        %v1806 = vrcp.pop %v1706
        %v1807 = vrcp.pop %v1711
        %v1808 = vrcp.pop %v1716
        %v1809 = vrcp.pop %v1721
        %v1810 = vrcp.pop %v1726
        %v1811 = vrcp.pop %v1731
        %v1812 = vrcp.pop %v1736
        %v1813 = vrcp.pop %v1741
        %v1814 = vrcp.pop %v1746
        %v1815 = vrcp.pop %v1751
        %v1816 = vrcp.pop %v1756
        %v1817 = vrcp.pop %v1761
        %v1818 = vrcp.pop %v1766
        %v1819 = vrcp.pop %v1771
        %v1820 = vrcp.pop %v1776
        %v1821 = vrcp.pop %v1781
        %v1822 = vrcp.pop %v1786
        %v1823 = vrcp.pop %v1791
        %v1824 = vmul.f32 %v1377, %v1792
        %v1825 = vmul.f32 %v1379, %v1792
        %v1826 = vmul.f32 %v1381, %v1792
        %v1827 = vmul.f32 %v1383, %v1792
        %v1828 = vmul.f32 %v1385, %v1793
        %v1829 = vmul.f32 %v1387, %v1793
        %v1830 = vmul.f32 %v1389, %v1793
        %v1831 = vmul.f32 %v1391, %v1793
        %v1832 = vmul.f32 %v1393, %v1794
        %v1833 = vmul.f32 %v1395, %v1794
        %v1834 = vmul.f32 %v1397, %v1794
        %v1835 = vmul.f32 %v1399, %v1794
        %v1836 = vmul.f32 %v1401, %v1795
        %v1837 = vmul.f32 %v1403, %v1795
        %v1838 = vmul.f32 %v1405, %v1795
        %v1839 = vmul.f32 %v1407, %v1795
        %v1840 = vmul.f32 %v1409, %v1796
        %v1841 = vmul.f32 %v1411, %v1796
        %v1842 = vmul.f32 %v1413, %v1796
        %v1843 = vmul.f32 %v1415, %v1796
        %v1844 = vmul.f32 %v1417, %v1797
        %v1845 = vmul.f32 %v1419, %v1797
        %v1846 = vmul.f32 %v1421, %v1797
        %v1847 = vmul.f32 %v1423, %v1797
        %v1848 = vmul.f32 %v1425, %v1798
        %v1849 = vmul.f32 %v1427, %v1798
        %v1850 = vmul.f32 %v1429, %v1798
        %v1851 = vmul.f32 %v1431, %v1798
        %v1852 = vmul.f32 %v1433, %v1799
        %v1853 = vmul.f32 %v1435, %v1799
        %v1854 = vmul.f32 %v1437, %v1799
        %v1855 = vmul.f32 %v1439, %v1799
        %v1856 = vmul.f32 %v1441, %v1800
        %v1857 = vmul.f32 %v1443, %v1800
        %v1858 = vmul.f32 %v1445, %v1800
        %v1859 = vmul.f32 %v1447, %v1800
        %v1860 = vmul.f32 %v1449, %v1801
        %v1861 = vmul.f32 %v1451, %v1801
        %v1862 = vmul.f32 %v1453, %v1801
        %v1863 = vmul.f32 %v1455, %v1801
        %v1864 = vmul.f32 %v1457, %v1802
        %v1865 = vmul.f32 %v1459, %v1802
        %v1866 = vmul.f32 %v1461, %v1802
        %v1867 = vmul.f32 %v1463, %v1802
        %v1868 = vmul.f32 %v1465, %v1803
        %v1869 = vmul.f32 %v1467, %v1803
        %v1870 = vmul.f32 %v1469, %v1803
        %v1871 = vmul.f32 %v1471, %v1803
        %v1872 = vmul.f32 %v1473, %v1804
        %v1873 = vmul.f32 %v1475, %v1804
        %v1874 = vmul.f32 %v1477, %v1804
        %v1875 = vmul.f32 %v1479, %v1804
        %v1876 = vmul.f32 %v1481, %v1805
        %v1877 = vmul.f32 %v1483, %v1805
        %v1878 = vmul.f32 %v1485, %v1805
        %v1879 = vmul.f32 %v1487, %v1805
        %v1880 = vmul.f32 %v1489, %v1806
        %v1881 = vmul.f32 %v1491, %v1806
        %v1882 = vmul.f32 %v1493, %v1806
        %v1883 = vmul.f32 %v1495, %v1806
        %v1884 = vmul.f32 %v1497, %v1807
        %v1885 = vmul.f32 %v1499, %v1807
        %v1886 = vmul.f32 %v1501, %v1807
        %v1887 = vmul.f32 %v1503, %v1807
        %v1888 = vmul.f32 %v1505, %v1808
        %v1889 = vmul.f32 %v1507, %v1808
        %v1890 = vmul.f32 %v1509, %v1808
        %v1891 = vmul.f32 %v1511, %v1808
        %v1892 = vmul.f32 %v1513, %v1809
        %v1893 = vmul.f32 %v1515, %v1809
        %v1894 = vmul.f32 %v1517, %v1809
        %v1895 = vmul.f32 %v1519, %v1809
        %v1896 = vmul.f32 %v1521, %v1810
        %v1897 = vmul.f32 %v1523, %v1810
        %v1898 = vmul.f32 %v1525, %v1810
        %v1899 = vmul.f32 %v1527, %v1810
        %v1900 = vmul.f32 %v1529, %v1811
        %v1901 = vmul.f32 %v1531, %v1811
        %v1902 = vmul.f32 %v1533, %v1811
        %v1903 = vmul.f32 %v1535, %v1811
        %v1904 = vmul.f32 %v1537, %v1812
        %v1905 = vmul.f32 %v1539, %v1812
        %v1906 = vmul.f32 %v1541, %v1812
        %v1907 = vmul.f32 %v1543, %v1812
        %v1908 = vmul.f32 %v1545, %v1813
        %v1909 = vmul.f32 %v1547, %v1813
        %v1910 = vmul.f32 %v1549, %v1813
        %v1911 = vmul.f32 %v1551, %v1813
        %v1912 = vmul.f32 %v1553, %v1814
        %v1913 = vmul.f32 %v1555, %v1814
        %v1914 = vmul.f32 %v1557, %v1814
        %v1915 = vmul.f32 %v1559, %v1814
        %v1916 = vmul.f32 %v1561, %v1815
        %v1917 = vmul.f32 %v1563, %v1815
        %v1918 = vmul.f32 %v1565, %v1815
        %v1919 = vmul.f32 %v1567, %v1815
        %v1920 = vmul.f32 %v1569, %v1816
        %v1921 = vmul.f32 %v1571, %v1816
        %v1922 = vmul.f32 %v1573, %v1816
        %v1923 = vmul.f32 %v1575, %v1816
        %v1924 = vmul.f32 %v1577, %v1817
        %v1925 = vmul.f32 %v1579, %v1817
        %v1926 = vmul.f32 %v1581, %v1817
        %v1927 = vmul.f32 %v1583, %v1817
        %v1928 = vmul.f32 %v1585, %v1818
        %v1929 = vmul.f32 %v1587, %v1818
        %v1930 = vmul.f32 %v1589, %v1818
        %v1931 = vmul.f32 %v1591, %v1818
        %v1932 = vmul.f32 %v1593, %v1819
        %v1933 = vmul.f32 %v1595, %v1819
        %v1934 = vmul.f32 %v1597, %v1819
        %v1935 = vmul.f32 %v1599, %v1819
        %v1936 = vmul.f32 %v1601, %v1820
        %v1937 = vmul.f32 %v1603, %v1820
        %v1938 = vmul.f32 %v1605, %v1820
        %v1939 = vmul.f32 %v1607, %v1820
        %v1940 = vmul.f32 %v1609, %v1821
        %v1941 = vmul.f32 %v1611, %v1821
        %v1942 = vmul.f32 %v1613, %v1821
        %v1943 = vmul.f32 %v1615, %v1821
        %v1944 = vmul.f32 %v1617, %v1822
        %v1945 = vmul.f32 %v1619, %v1822
        %v1946 = vmul.f32 %v1621, %v1822
        %v1947 = vmul.f32 %v1623, %v1822
        %v1948 = vmul.f32 %v1625, %v1823
        %v1949 = vmul.f32 %v1627, %v1823
        %v1950 = vmul.f32 %v1629, %v1823
        %v1951 = vmul.f32 %v1631, %v1823
        %v1952 = vpack.c.bf16 %v1828, %v1824
        %v1953 = vpack.c.bf16 %v1829, %v1825
        %v1954 = vpack.c.bf16 %v1830, %v1826
        %v1955 = vpack.c.bf16 %v1831, %v1827
        %v1956 = vpack.c.bf16 %v1836, %v1832
        %v1957 = vpack.c.bf16 %v1837, %v1833
        %v1958 = vpack.c.bf16 %v1838, %v1834
        %v1959 = vpack.c.bf16 %v1839, %v1835
        %v1960 = vpack.c.bf16 %v1844, %v1840
        %v1961 = vpack.c.bf16 %v1845, %v1841
        %v1962 = vpack.c.bf16 %v1846, %v1842
        %v1963 = vpack.c.bf16 %v1847, %v1843
        %v1964 = vpack.c.bf16 %v1852, %v1848
        %v1965 = vpack.c.bf16 %v1853, %v1849
        %v1966 = vpack.c.bf16 %v1854, %v1850
        %v1967 = vpack.c.bf16 %v1855, %v1851
        %v1968 = vpack.c.bf16 %v1860, %v1856
        %v1969 = vpack.c.bf16 %v1861, %v1857
        %v1970 = vpack.c.bf16 %v1862, %v1858
        %v1971 = vpack.c.bf16 %v1863, %v1859
        %v1972 = vpack.c.bf16 %v1868, %v1864
        %v1973 = vpack.c.bf16 %v1869, %v1865
        %v1974 = vpack.c.bf16 %v1870, %v1866
        %v1975 = vpack.c.bf16 %v1871, %v1867
        %v1976 = vpack.c.bf16 %v1876, %v1872
        %v1977 = vpack.c.bf16 %v1877, %v1873
        %v1978 = vpack.c.bf16 %v1878, %v1874
        %v1979 = vpack.c.bf16 %v1879, %v1875
        %v1980 = vpack.c.bf16 %v1884, %v1880
        %v1981 = vpack.c.bf16 %v1885, %v1881
        %v1982 = vpack.c.bf16 %v1886, %v1882
        %v1983 = vpack.c.bf16 %v1887, %v1883
        %v1984 = vpack.c.bf16 %v1892, %v1888
        %v1985 = vpack.c.bf16 %v1893, %v1889
        %v1986 = vpack.c.bf16 %v1894, %v1890
        %v1987 = vpack.c.bf16 %v1895, %v1891
        %v1988 = vpack.c.bf16 %v1900, %v1896
        %v1989 = vpack.c.bf16 %v1901, %v1897
        %v1990 = vpack.c.bf16 %v1902, %v1898
        %v1991 = vpack.c.bf16 %v1903, %v1899
        %v1992 = vpack.c.bf16 %v1908, %v1904
        %v1993 = vpack.c.bf16 %v1909, %v1905
        %v1994 = vpack.c.bf16 %v1910, %v1906
        %v1995 = vpack.c.bf16 %v1911, %v1907
        %v1996 = vpack.c.bf16 %v1916, %v1912
        %v1997 = vpack.c.bf16 %v1917, %v1913
        %v1998 = vpack.c.bf16 %v1918, %v1914
        %v1999 = vpack.c.bf16 %v1919, %v1915
        %v2000 = vpack.c.bf16 %v1924, %v1920
        %v2001 = vpack.c.bf16 %v1925, %v1921
        %v2002 = vpack.c.bf16 %v1926, %v1922
        %v2003 = vpack.c.bf16 %v1927, %v1923
        %v2004 = vpack.c.bf16 %v1932, %v1928
        %v2005 = vpack.c.bf16 %v1933, %v1929
        %v2006 = vpack.c.bf16 %v1934, %v1930
        %v2007 = vpack.c.bf16 %v1935, %v1931
        %v2008 = vpack.c.bf16 %v1940, %v1936
        %v2009 = vpack.c.bf16 %v1941, %v1937
        %v2010 = vpack.c.bf16 %v1942, %v1938
        %v2011 = vpack.c.bf16 %v1943, %v1939
        %v2012 = vpack.c.bf16 %v1948, %v1944
        %v2013 = vpack.c.bf16 %v1949, %v1945
        %v2014 = vpack.c.bf16 %v1950, %v1946
        %v2015 = vpack.c.bf16 %v1951, %v1947
        %v2016 = vld [vmem:[#allocation2] sm:$0xff]
        %v2017 = vld [vmem:[#allocation2 + $0x8] sm:$0xff]
        %v2018 = vld [vmem:[#allocation2 + $0x10] sm:$0xff]
        %v2019 = vld [vmem:[#allocation2 + $0x18] sm:$0xff]
        %v2020 = vld [vmem:[#allocation2 + $0x20] sm:$0xff]
        %v2021 = vld [vmem:[#allocation2 + $0x28] sm:$0xff]
        %v2022 = vld [vmem:[#allocation2 + $0x30] sm:$0xff]
        %v2023 = vld [vmem:[#allocation2 + $0x38] sm:$0xff]
        %v2024 = vld [vmem:[%s308] sm:$0xff]
        %v2025 = vld [vmem:[%s308 + $0x8] sm:$0xff]
        %v2028 = vunpack.c.l.b16 %v2024
        %v2029 = vunpack.c.h.b16 %v2024
        %v2030 = vunpack.c.l.b16 %v2025
        %v2031 = vunpack.c.h.b16 %v2025
        %v2032 = vpack.c.b16 %v2030, %v2028
        %v2033 = vpack.c.b16 %v2031, %v2029
        %2036 = vmatpush.bf16.msra.mxu0 %v1980
        %2037 = vmatpush.bf16.msra.mxu0 %v1976
        %2038 = vmatpush.bf16.msra.mxu0 %v1972
        %2039 = vmatpush.bf16.msra.mxu0 %v1968
        %2040 = vmatpush.bf16.msra.mxu0 %v1964
        %2041 = vmatpush.bf16.msra.mxu0 %v1960
        %2042 = vmatpush.bf16.msra.mxu0 %v1956
        %2043 = vmatpush.bf16.msra.mxu0 %v1952
        %2044 = vmatmul.bf16.gmra.mxu0 %v2032
        %v2045 = vpop.f32.mrf.mxu0
        %v2046 = vadd.f32 0.0, %v2045
        %v2047 = vpop.f32.mrf.mxu0
        %v2048 = vadd.f32 0.0, %v2047
        %2049 = vdwg.mxu0
        %2050 = vmatpush.bf16.msra.mxu0 %v2012
        %2051 = vmatpush.bf16.msra.mxu0 %v2008
        %2052 = vmatpush.bf16.msra.mxu0 %v2004
        %2053 = vmatpush.bf16.msra.mxu0 %v2000
        %2054 = vmatpush.bf16.msra.mxu0 %v1996
        %2055 = vmatpush.bf16.msra.mxu0 %v1992
        %2056 = vmatpush.bf16.msra.mxu0 %v1988
        %2057 = vmatpush.bf16.msra.mxu0 %v1984
        %2058 = vmatmul.bf16.gmra.mxu0 %v2033
        %v2059 = vpop.f32.mrf.mxu0
        %v2060 = vadd.f32 %v2046, %v2059
        %v2061 = vpop.f32.mrf.mxu0
        %v2062 = vadd.f32 %v2048, %v2061
        %2063 = vdwg.mxu0
        %2064 = vmatpush.bf16.msra.mxu0 %v1981
        %2065 = vmatpush.bf16.msra.mxu0 %v1977
        %2066 = vmatpush.bf16.msra.mxu0 %v1973
        %2067 = vmatpush.bf16.msra.mxu0 %v1969
        %2068 = vmatpush.bf16.msra.mxu0 %v1965
        %2069 = vmatpush.bf16.msra.mxu0 %v1961
        %2070 = vmatpush.bf16.msra.mxu0 %v1957
        %2071 = vmatpush.bf16.msra.mxu0 %v1953
        %2072 = vmatmul.bf16.gmra.mxu0 %v2032
        %v2073 = vpop.f32.mrf.mxu0
        %v2074 = vadd.f32 0.0, %v2073
        %v2075 = vpop.f32.mrf.mxu0
        %v2076 = vadd.f32 0.0, %v2075
        %2077 = vdwg.mxu0
        %2078 = vmatpush.bf16.msra.mxu0 %v2013
        %2079 = vmatpush.bf16.msra.mxu0 %v2009
        %2080 = vmatpush.bf16.msra.mxu0 %v2005
        %2081 = vmatpush.bf16.msra.mxu0 %v2001
        %2082 = vmatpush.bf16.msra.mxu0 %v1997
        %2083 = vmatpush.bf16.msra.mxu0 %v1993
        %2084 = vmatpush.bf16.msra.mxu0 %v1989
        %2085 = vmatpush.bf16.msra.mxu0 %v1985
        %2086 = vmatmul.bf16.gmra.mxu0 %v2033
        %v2087 = vpop.f32.mrf.mxu0
        %v2088 = vadd.f32 %v2074, %v2087
        %v2089 = vpop.f32.mrf.mxu0
        %v2090 = vadd.f32 %v2076, %v2089
        %2091 = vdwg.mxu0
        %2092 = vmatpush.bf16.msra.mxu0 %v1982
        %2093 = vmatpush.bf16.msra.mxu0 %v1978
        %2094 = vmatpush.bf16.msra.mxu0 %v1974
        %2095 = vmatpush.bf16.msra.mxu0 %v1970
        %2096 = vmatpush.bf16.msra.mxu0 %v1966
        %2097 = vmatpush.bf16.msra.mxu0 %v1962
        %2098 = vmatpush.bf16.msra.mxu0 %v1958
        %2099 = vmatpush.bf16.msra.mxu0 %v1954
        %2100 = vmatmul.bf16.gmra.mxu0 %v2032
        %v2101 = vpop.f32.mrf.mxu0
        %v2102 = vadd.f32 0.0, %v2101
        %v2103 = vpop.f32.mrf.mxu0
        %v2104 = vadd.f32 0.0, %v2103
        %2105 = vdwg.mxu0
        %2106 = vmatpush.bf16.msra.mxu0 %v2014
        %2107 = vmatpush.bf16.msra.mxu0 %v2010
        %2108 = vmatpush.bf16.msra.mxu0 %v2006
        %2109 = vmatpush.bf16.msra.mxu0 %v2002
        %2110 = vmatpush.bf16.msra.mxu0 %v1998
        %2111 = vmatpush.bf16.msra.mxu0 %v1994
        %2112 = vmatpush.bf16.msra.mxu0 %v1990
        %2113 = vmatpush.bf16.msra.mxu0 %v1986
        %2114 = vmatmul.bf16.gmra.mxu0 %v2033
        %v2115 = vpop.f32.mrf.mxu0
        %v2116 = vadd.f32 %v2102, %v2115
        %v2117 = vpop.f32.mrf.mxu0
        %v2118 = vadd.f32 %v2104, %v2117
        %2119 = vdwg.mxu0
        %2120 = vmatpush.bf16.msra.mxu0 %v1983
        %2121 = vmatpush.bf16.msra.mxu0 %v1979
        %2122 = vmatpush.bf16.msra.mxu0 %v1975
        %2123 = vmatpush.bf16.msra.mxu0 %v1971
        %2124 = vmatpush.bf16.msra.mxu0 %v1967
        %2125 = vmatpush.bf16.msra.mxu0 %v1963
        %2126 = vmatpush.bf16.msra.mxu0 %v1959
        %2127 = vmatpush.bf16.msra.mxu0 %v1955
        %2128 = vmatmul.bf16.gmra.mxu0 %v2032
        %v2129 = vpop.f32.mrf.mxu0
        %v2130 = vadd.f32 0.0, %v2129
        %v2131 = vpop.f32.mrf.mxu0
        %v2132 = vadd.f32 0.0, %v2131
        %2133 = vdwg.mxu0
        %2134 = vmatpush.bf16.msra.mxu0 %v2015
        %2135 = vmatpush.bf16.msra.mxu0 %v2011
        %2136 = vmatpush.bf16.msra.mxu0 %v2007
        %2137 = vmatpush.bf16.msra.mxu0 %v2003
        %2138 = vmatpush.bf16.msra.mxu0 %v1999
        %2139 = vmatpush.bf16.msra.mxu0 %v1995
        %2140 = vmatpush.bf16.msra.mxu0 %v1991
        %2141 = vmatpush.bf16.msra.mxu0 %v1987
        %2142 = vmatmul.bf16.gmra.mxu0 %v2033
        %v2143 = vpop.f32.mrf.mxu0
        %v2144 = vadd.f32 %v2130, %v2143
        %v2145 = vpop.f32.mrf.mxu0
        %v2146 = vadd.f32 %v2132, %v2145
        %2147 = vdwg.mxu0
        %v2148 = vadd.f32 %v2016, %v2060
        %v2149 = vadd.f32 %v2017, %v2088
        %v2150 = vadd.f32 %v2018, %v2116
        %v2151 = vadd.f32 %v2019, %v2144
        %v2152 = vadd.f32 %v2020, %v2062
        %v2153 = vadd.f32 %v2021, %v2090
        %v2154 = vadd.f32 %v2022, %v2118
        %v2155 = vadd.f32 %v2023, %v2146
        %2156 = vst [vmem:[#allocation2] sm:$0xff] %v2148
        %2157 = vst [vmem:[#allocation2 + $0x8] sm:$0xff] %v2149
        %2158 = vst [vmem:[#allocation2 + $0x10] sm:$0xff] %v2150
        %2159 = vst [vmem:[#allocation2 + $0x18] sm:$0xff] %v2151
        %2160 = vst [vmem:[#allocation2 + $0x20] sm:$0xff] %v2152
        %2161 = vst [vmem:[#allocation2 + $0x28] sm:$0xff] %v2153
        %2162 = vst [vmem:[#allocation2 + $0x30] sm:$0xff] %v2154
        %2163 = vst [vmem:[#allocation2 + $0x38] sm:$0xff] %v2155
        %p2164 = scmp.eq.s32.totalorder %s23, 1
        // Predicated region
        $region79: #{self_attention_forward.2} parent=69 // pred_check
          %p2165 = pneg %p2164
        $region80: #{self_attention_forward.2} parent=69 // pred_check_branch
          %2167 = sbr.rel (%p2165) target = $region82
        $region81: #{self_attention_forward.2} parent=69 // pred_region
          %v2168 = vld [vmem:[#allocation2] sm:$0xff]
          %v2169 = vld [vmem:[#allocation2 + $0x8] sm:$0xff]
          %v2170 = vld [vmem:[#allocation2 + $0x10] sm:$0xff]
          %v2171 = vld [vmem:[#allocation2 + $0x18] sm:$0xff]
          %v2172 = vld [vmem:[#allocation2 + $0x20] sm:$0xff]
          %v2173 = vld [vmem:[#allocation2 + $0x28] sm:$0xff]
          %v2174 = vld [vmem:[#allocation2 + $0x30] sm:$0xff]
          %v2175 = vld [vmem:[#allocation2 + $0x38] sm:$0xff]
          %v2176 = vadd.f32 %v2168, %v2169
          %v2177 = vadd.f32 %v2176, %v2170
          %v2178 = vadd.f32 %v2177, %v2171
          %2179 = vadd.xlane.f32.xlu0 %v2178
          %v2180 = vpop.xlane.xlu0 %2179
          %v2181 = vadd.f32 %v2172, %v2173
          %v2182 = vadd.f32 %v2181, %v2174
          %v2183 = vadd.f32 %v2182, %v2175
          %2184 = vadd.xlane.f32.xlu0 %v2183
          %v2185 = vpop.xlane.xlu0 %2184
          %vm2186 = vcmask 7168
          %2187 = vst.msk [vmem:[%s384] sm:$0xff] %vm2186, %v2180
          %2188 = vst.msk [vmem:[%s384 + $0x8] sm:$0xff] %vm2186, %v2185
          %v2189 = vmul.f32 %v2168, %v2168
          %v2190 = vmul.f32 %v2169, %v2169
          %v2191 = vmul.f32 %v2170, %v2170
          %v2192 = vmul.f32 %v2171, %v2171
          %v2193 = vmul.f32 %v2172, %v2172
          %v2194 = vmul.f32 %v2173, %v2173
          %v2195 = vmul.f32 %v2174, %v2174
          %v2196 = vmul.f32 %v2175, %v2175
          %v2197 = vadd.f32 %v2189, %v2190
          %v2198 = vadd.f32 %v2197, %v2191
          %v2199 = vadd.f32 %v2198, %v2192
          %2200 = vadd.xlane.f32.xlu0 %v2199
          %v2201 = vpop.xlane.xlu0 %2200
          %v2202 = vadd.f32 %v2193, %v2194
          %v2203 = vadd.f32 %v2202, %v2195
          %v2204 = vadd.f32 %v2203, %v2196
          %2205 = vadd.xlane.f32.xlu0 %v2204
          %v2206 = vpop.xlane.xlu0 %2205
          %2207 = vst.msk [vmem:[%s389] sm:$0xff] %vm2186, %v2201
          %2208 = vst.msk [vmem:[%s389 + $0x8] sm:$0xff] %vm2186, %v2206
          %v2209 = vpack.c.bf16 %v2169, %v2168
          %v2210 = vpack.c.bf16 %v2171, %v2170
          %v2211 = vpack.c.bf16 %v2173, %v2172
          %v2212 = vpack.c.bf16 %v2175, %v2174
          %2213 = vst [vmem:[%s379] sm:$0xff] %v2209
          %2214 = vst [vmem:[%s379 + $0x8] sm:$0xff] %v2210
          %2215 = vst [vmem:[%s379 + $0x10] sm:$0xff] %v2211
          %2216 = vst [vmem:[%s379 + $0x18] sm:$0xff] %v2212
        $region82: #{self_attention_forward.2} parent=69 // pred_fallthru
          _
        %p2217 = scmp.lt.s32.totalorder %s22, 1
        %s2218 = scalar_select %p2217, %s22, 1
        %s2219 = smul.addr %s2218, 8
        %s2220 = smul.addr %s2219, 4
        %s2221 = scalar_lea.vmem %s4, %s2220
        %p2222 = scmp.lt.s32.totalorder %s22, 1
        %s2223 = scalar_select %p2222, %s22, 1
        %s2224 = smul.addr %s2223, 2
        %s2225 = smul.addr %s2224, 8
        %s2226 = scalar_lea.vmem %s5, %s2225
        %p2227 = scmp.lt.s32.totalorder %s22, 1
        %s2228 = scalar_select %p2227, %s22, 1
        %s2229 = smul.addr %s2228, 2
        %s2230 = smul.addr %s2229, 8
        %s2231 = scalar_lea.vmem %s6, %s2230
        // Predicated region
        $region83: #{self_attention_forward.2} parent=69 // pred_check
          %p2232 = pneg %p151
        $region84: #{self_attention_forward.2} parent=69 // pred_check_branch
          %2234 = sbr.rel (%p2232) target = $region86
        $region85: #{self_attention_forward.2} parent=69 // pred_region
          _
        $region86: #{self_attention_forward.2} parent=69 // pred_fallthru
          _
        // Predicated region
        $region87: #{self_attention_forward.2} parent=69 // pred_check
          %p2235 = pneg %p177
        $region88: #{self_attention_forward.2} parent=69 // pred_check_branch
          %2237 = sbr.rel (%p2235) target = $region90
        $region89: #{self_attention_forward.2} parent=69 // pred_region
          _
        $region90: #{self_attention_forward.2} parent=69 // pred_fallthru
          _
        // Predicated region
        $region91: #{self_attention_forward.2} parent=69 // pred_check
          %p2238 = pneg %p203
        $region92: #{self_attention_forward.2} parent=69 // pred_check_branch
          %2240 = sbr.rel (%p2238) target = $region94
        $region93: #{self_attention_forward.2} parent=69 // pred_region
          _
        $region94: #{self_attention_forward.2} parent=69 // pred_fallthru
          _
      $region70: #{self_attention_forward.2} parent=5 // pred_fallthru
        _
      %p2241 = scmp.le.s32.totalorder 2, %s13
      // Predicated region
      $region95: #{self_attention_forward.2} parent=5 // pred_check
        %p2242 = pneg %p2241
      $region96: #{self_attention_forward.2} parent=5 // pred_check_branch
        %2244 = sbr.rel (%p2242) target = $region98
      $region97: #{self_attention_forward.2} parent=5 // pred_region
        %s2245 = ssub.s32 %s13, 2
        // Predicated region
        $region99: #{self_attention_forward.2} parent=97 // pred_check
          %p2246 = pneg %p157
        $region100: #{self_attention_forward.2} parent=97 // pred_check_branch
          %2248 = sbr.rel (%p2246) target = $region102
        $region101: #{self_attention_forward.2} parent=97 // pred_region
          %p2249 = scmp.lt.s32.totalorder %s24, 1
          %s2250 = scalar_select %p2249, %s24, 1
          %s2251 = smul.addr %s2250, 8
          %s2252 = smul.addr %s2251, 4
          %s2253 = scalar_lea.vmem %s4, %s2252
        $region102: #{self_attention_forward.2} parent=97 // pred_fallthru
          _
        // Predicated region
        $region103: #{self_attention_forward.2} parent=97 // pred_check
          %p2254 = pneg %p183
        $region104: #{self_attention_forward.2} parent=97 // pred_check_branch
          %2256 = sbr.rel (%p2254) target = $region106
        $region105: #{self_attention_forward.2} parent=97 // pred_region
          %p2257 = scmp.lt.s32.totalorder %s24, 1
          %s2258 = scalar_select %p2257, %s24, 1
          %s2259 = smul.addr %s2258, 2
          %s2260 = smul.addr %s2259, 8
          %s2261 = scalar_lea.vmem %s5, %s2260
        $region106: #{self_attention_forward.2} parent=97 // pred_fallthru
          _
        // Predicated region
        $region107: #{self_attention_forward.2} parent=97 // pred_check
          %p2262 = pneg %p209
        $region108: #{self_attention_forward.2} parent=97 // pred_check_branch
          %2264 = sbr.rel (%p2262) target = $region110
        $region109: #{self_attention_forward.2} parent=97 // pred_region
          %p2265 = scmp.lt.s32.totalorder %s24, 1
          %s2266 = scalar_select %p2265, %s24, 1
          %s2267 = smul.addr %s2266, 2
          %s2268 = smul.addr %s2267, 8
          %s2269 = scalar_lea.vmem %s6, %s2268
        $region110: #{self_attention_forward.2} parent=97 // pred_fallthru
          _
      $region98: #{self_attention_forward.2} parent=5 // pred_fallthru
        _
    $region6: #{self_attention_forward.2} parent=1 // loop_footer
      %s17 = sadd.s32 1, %s13
    $region7: #{self_attention_forward.2} parent=1 // loop_footer_branch
      %12 = sbr.rel target = $region3
    $region8: #{self_attention_forward.2} parent=1 // loop_exit
      _

</llo_original>
